<compile_context>
chip_gen: v7x
topology: tpu7x:2x2x1
jax: 0.10.0
libtpu: 0.0.40
codegen_flags: <defaults>
</compile_context>

<pallas_src>
import functools
import math

import jax
import jax.numpy as jnp
from jax.experimental import pallas as pl
from jax.experimental.pallas import tpu as pltpu


def _mha_kernel(*refs, h, d_k, scale, has_mask):
    """One (batch, q-tile) grid step.

    Ref layout:
      q_ref:   (TQ, D)   compute dtype     k_ref/v_ref: (S_k, D) compute dtype
      m_ref:   (TQ, S_k) int32             (only when has_mask)
      w*_ref:  (D, D)    compute dtype, (in, out) layout == PyTorch W^T
      b*_ref:  (1, D)    float32
      out_ref: (TQ, D)                     attn_ref: (h, TQ, S_k)
      ctx_ref: (TQ, D)   compute-dtype VMEM scratch (merged heads)
    """
    if has_mask:
        (q_ref, k_ref, v_ref, m_ref,
         wq_ref, bq_ref, wk_ref, bk_ref, wv_ref, bv_ref, wo_ref, bo_ref,
         out_ref, attn_ref, ctx_ref) = refs
    else:
        (q_ref, k_ref, v_ref,
         wq_ref, bq_ref, wk_ref, bk_ref, wv_ref, bv_ref, wo_ref, bo_ref,
         out_ref, attn_ref, ctx_ref) = refs
        m_ref = None

    f32 = jnp.float32
    cdt = wq_ref.dtype  # matmul operand dtype (bf16 in prod); accumulate in f32

    # Full-width input projections: one big MXU matmul each (not h slivers).
    # Note: K/V projections are recomputed per q-tile (K/V blocks are full per
    # batch); acceptable since nq is small and keeps both grid axes parallel.
    q = jnp.dot(q_ref[...], wq_ref[...], preferred_element_type=f32) + bq_ref[...]
    k = jnp.dot(k_ref[...], wk_ref[...], preferred_element_type=f32) + bk_ref[...]
    v = jnp.dot(v_ref[...], wv_ref[...], preferred_element_type=f32) + bv_ref[...]

    if m_ref is not None:
        masked = m_ref[...] == 0            # (TQ, S_k), shared across heads

    for head in range(h):                   # static unroll over heads
        lo = head * d_k
        qh = q[:, lo:lo + d_k].astype(cdt)  # static lane slices of projections
        kh = k[:, lo:lo + d_k].astype(cdt)
        vh = v[:, lo:lo + d_k].astype(cdt)

        # scores = (qh @ kh^T) * (1/sqrt(d_k)); softmax in f32.
        s = jax.lax.dot_general(qh, kh, (((1,), (1,)), ((), ())),
                                preferred_element_type=f32) * scale
        if m_ref is not None:
            # masked_fill(mask == 0, -inf), exactly as the PyTorch module.
            # (A fully masked row yields NaN in both implementations.)
            s = jnp.where(masked, -jnp.inf, s)

        m_row = jnp.max(s, axis=-1, keepdims=True)          # XLU
        e = jnp.exp(s - m_row)                              # EUP
        p = e * pl.reciprocal(jnp.sum(e, axis=-1, keepdims=True), approx=True)

        attn_ref[head, :, :] = p.astype(attn_ref.dtype)
        ctx_ref[:, lo:lo + d_k] = jnp.dot(
            p.astype(cdt), vh, preferred_element_type=f32).astype(ctx_ref.dtype)

    # Merged-head context -> output projection (single full-D MXU contraction).
    out = jnp.dot(ctx_ref[...], wo_ref[...], preferred_element_type=f32) + bo_ref[...]
    out_ref[...] = out.astype(out_ref.dtype)


def multi_headed_attention(query, key, value,
                           wq, bq, wk, bk, wv, bv, wo, bo,
                           *, h, mask=None,
                           compute_dtype=jnp.bfloat16,
                           attn_dtype=None, out_dtype=None,
                           q_tile=256):
    """query: (B, S_q, D); key/value: (B, S_k, D); weights (D, D) in (in, out)
    layout (i.e. transposed PyTorch nn.Linear weight); biases (D,).
    mask: None, (S_q, S_k), (1, S_q, S_k) or (B, S_q, S_k); mask==0 is masked.
    Returns (output (B, S_q, D), attention_map (B, h, S_q, S_k)).

    q_tile: S_q tile per grid step (use ~128 on v5e, ~256 on v6e/v7x)."""
    B, S_q, d_model = query.shape
    _, S_k, _ = key.shape
    assert d_model % h == 0
    d_k = d_model // h
    scale = 1.0 / math.sqrt(d_k)

    cdt = compute_dtype
    attn_dtype = cdt if attn_dtype is None else attn_dtype
    out_dtype = cdt if out_dtype is None else out_dtype

    tq = min(q_tile, S_q)
    nq = -(-S_q // tq)  # ceil-div; boundary blocks handled by Pallas

    c = lambda x: x.astype(cdt)
    row_f32 = lambda b: b.reshape(1, -1).astype(jnp.float32)

    has_mask = mask is not None
    operands = [c(query), c(key), c(value)]
    in_specs = [
        pl.BlockSpec((None, tq, d_model), lambda b, qi: (b, qi, 0)),   # q tile
        pl.BlockSpec((None, S_k, d_model), lambda b, qi: (b, 0, 0)),   # k (full)
        pl.BlockSpec((None, S_k, d_model), lambda b, qi: (b, 0, 0)),   # v (full)
    ]
    if has_mask:
        mask = jnp.asarray(mask)
        if mask.ndim == 2:
            mask = mask[None]
        mask = mask.astype(jnp.int32)
        if mask.shape[0] == 1:
            # Batch-invariant mask: single HBM copy, constant batch index.
            mask = jnp.broadcast_to(mask, (1, S_q, S_k))
            m_spec = pl.BlockSpec((None, tq, S_k), lambda b, qi: (0, qi, 0))
        else:
            mask = jnp.broadcast_to(mask, (B, S_q, S_k))
            m_spec = pl.BlockSpec((None, tq, S_k), lambda b, qi: (b, qi, 0))
        operands.append(mask)
        in_specs.append(m_spec)

    # Weights/biases: constant index_map -> resident blocks across grid steps.
    w_spec = pl.BlockSpec((d_model, d_model), lambda b, qi: (0, 0))
    b_spec = pl.BlockSpec((1, d_model), lambda b, qi: (0, 0))
    operands += [c(wq), row_f32(bq), c(wk), row_f32(bk),
                 c(wv), row_f32(bv), c(wo), row_f32(bo)]
    in_specs += [w_spec, b_spec] * 4

    out_specs = (
        pl.BlockSpec((None, tq, d_model), lambda b, qi: (b, qi, 0)),
        pl.BlockSpec((None, h, tq, S_k), lambda b, qi: (b, 0, qi, 0)),
    )
    out_shape = (
        jax.ShapeDtypeStruct((B, S_q, d_model), out_dtype),
        jax.ShapeDtypeStruct((B, h, S_q, S_k), attn_dtype),
    )

    # Advisory cost estimate for XLA's scheduler around this custom call.
    flops = 2 * B * (2 * S_q * d_model * d_model            # q proj + out proj
                     + 2 * nq * S_k * d_model * d_model     # k/v proj per tile
                     + 2 * S_q * S_k * d_model)             # scores + p@v
    transcendentals = B * h * S_q * S_k                     # softmax exp
    bytes_accessed = int(
        sum(int(x.size) * x.dtype.itemsize for x in operands)
        + B * S_q * d_model * jnp.dtype(out_dtype).itemsize
        + B * h * S_q * S_k * jnp.dtype(attn_dtype).itemsize)
    cost = pl.CostEstimate(flops=flops, transcendentals=transcendentals,
                           bytes_accessed=bytes_accessed)

    # VMEM budget derived from the actual (double-buffered) block footprint;
    # floor at the usual scoped default, cap at physical.
    itm = jnp.dtype(cdt).itemsize
    vmem_est = (
        2 * tq * d_model * itm                               # q blocks
        + 2 * 2 * S_k * d_model * itm                        # k, v blocks
        + (2 * tq * S_k * 4 if has_mask else 0)              # mask blocks
        + 2 * 4 * d_model * d_model * itm                    # weight blocks
        + 2 * 4 * d_model * 4                                # bias blocks (f32)
        + 2 * tq * d_model * jnp.dtype(out_dtype).itemsize   # out blocks
        + 2 * h * tq * S_k * jnp.dtype(attn_dtype).itemsize  # attn blocks
        + tq * d_model * itm                                 # ctx scratch
    )
    vmem_limit = int(min(max(2 * vmem_est, 32 * 1024 * 1024), 128 * 1024 * 1024))

    kernel = functools.partial(_mha_kernel, h=h, d_k=d_k, scale=scale,
                               has_mask=has_mask)

    out, attn = pl.pallas_call(
        kernel,
        out_shape=out_shape,
        grid_spec=pltpu.PrefetchScalarGridSpec(
            num_scalar_prefetch=0,
            grid=(B, nq),
            in_specs=in_specs,
            out_specs=out_specs,
            scratch_shapes=[pltpu.VMEM((tq, d_model), cdt)],
        ),
        compiler_params=pltpu.CompilerParams(
            # Both axes are independent work -> shards across v7x's 2 TCs
            # (even when B == 1); neutral on single-TC v5e/v6e.
            dimension_semantics=("parallel", "parallel"),
            vmem_limit_bytes=vmem_limit,
        ),
        cost_estimate=cost,
    )(*operands)

    return out, attn


def mha_reference(q, k, v, mask, wq, bq, wk, bk, wv, bv, wo, bo, h,
                  compute_dtype=jnp.float32):
    """Pure-JAX reference mirroring the PyTorch module (eval mode), with the
    same matmul-operand dtype as the kernel (f32 accumulation)."""
    B, S_q, D = q.shape
    S_k = k.shape[1]
    d_k = D // h
    c = lambda x: x.astype(compute_dtype)
    lin = lambda x, w, b: (jnp.einsum('bsd,de->bse', c(x), c(w),
                                      preferred_element_type=jnp.float32)
                           + b.astype(jnp.float32))
    split = lambda x, S: x.reshape(B, S, h, d_k).transpose(0, 2, 1, 3)
    qp = split(lin(q, wq, bq), S_q)
    kp = split(lin(k, wk, bk), S_k)
    vp = split(lin(v, wv, bv), S_k)
    scores = jnp.einsum('bhqd,bhkd->bhqk', c(qp), c(kp),
                        preferred_element_type=jnp.float32) / math.sqrt(d_k)
    if mask is not None:
        scores = jnp.where(mask[:, None, :, :] == 0, -jnp.inf, scores)
    p = jax.nn.softmax(scores, axis=-1)
    x = jnp.einsum('bhqk,bhkd->bhqd', c(p), c(vp),
                   preferred_element_type=jnp.float32)
    x = x.transpose(0, 2, 1, 3).reshape(B, S_q, D)
    out = jnp.einsum('bsd,de->bse', c(x), c(wo),
                     preferred_element_type=jnp.float32) + bo
    return out, p


if __name__ == "__main__":
    # Small shapes consistent with the module: batch=2, seq=8, heads=4,
    # d_model=32 (d_k=8).
    B, S, h, d_model = 2, 8, 4, 32

    key = jax.random.PRNGKey(0)
    ks = jax.random.split(key, 11)
    w_scale = 1.0 / math.sqrt(d_model)
    init = lambda kk, shape, s=1.0: jax.random.normal(kk, shape, jnp.float32) * s

    # Weights stored in (in, out) layout == transposed PyTorch nn.Linear weight.
    wq, bq = init(ks[0], (d_model, d_model), w_scale), init(ks[1], (d_model,), w_scale)
    wk, bk = init(ks[2], (d_model, d_model), w_scale), init(ks[3], (d_model,), w_scale)
    wv, bv = init(ks[4], (d_model, d_model), w_scale), init(ks[5], (d_model,), w_scale)
    wo, bo = init(ks[6], (d_model, d_model), w_scale), init(ks[7], (d_model,), w_scale)

    q = init(ks[8], (B, S, d_model))
    k_in = init(ks[9], (B, S, d_model))
    v_in = init(ks[10], (B, S, d_model))

    # Batch-invariant causal mask (mask==0 -> masked out); exercises the
    # constant-index-map mask path (one HBM copy instead of B copies).
    causal = jnp.tril(jnp.ones((S, S), jnp.int32))

    out, attn = multi_headed_attention(q, k_in, v_in,
                                       wq, bq, wk, bk, wv, bv, wo, bo,
                                       h=h, mask=causal,
                                       compute_dtype=jnp.bfloat16)
    out = jax.block_until_ready(out)
    attn = jax.block_until_ready(attn)

    ref_out, ref_attn = mha_reference(q, k_in, v_in,
                                      jnp.broadcast_to(causal, (B, S, S)),
                                      wq, bq, wk, bk, wv, bv, wo, bo, h,
                                      compute_dtype=jnp.bfloat16)

    assert out.shape == (B, S, d_model), out.shape
    assert attn.shape == (B, h, S, S), attn.shape
    assert jnp.allclose(out.astype(jnp.float32), ref_out,
                        atol=2e-2, rtol=2e-2), "output mismatch"
    assert jnp.allclose(attn.astype(jnp.float32), ref_attn,
                        atol=2e-2, rtol=2e-2), "attention map mismatch"

    print("KERNEL_OK")
</pallas_src>

<mosaic_0001>
module attributes {stable_mosaic.version = 11 : i64} {
  func.func @_mha_kernel(%arg0: i32, %arg1: i32, %arg2: memref<1x8x32xbf16, #tpu.memory_space<vmem>>, %arg3: memref<1x8x32xbf16, #tpu.memory_space<vmem>>, %arg4: memref<1x8x32xbf16, #tpu.memory_space<vmem>>, %arg5: memref<1x8x8xi32, #tpu.memory_space<vmem>>, %arg6: memref<32x32xbf16, #tpu.memory_space<vmem>>, %arg7: memref<1x32xf32, #tpu.memory_space<vmem>>, %arg8: memref<32x32xbf16, #tpu.memory_space<vmem>>, %arg9: memref<1x32xf32, #tpu.memory_space<vmem>>, %arg10: memref<32x32xbf16, #tpu.memory_space<vmem>>, %arg11: memref<1x32xf32, #tpu.memory_space<vmem>>, %arg12: memref<32x32xbf16, #tpu.memory_space<vmem>>, %arg13: memref<1x32xf32, #tpu.memory_space<vmem>>, %arg14: memref<1x8x32xbf16, #tpu.memory_space<vmem>>, %arg15: memref<1x4x8x8xbf16, #tpu.memory_space<vmem>>, %arg16: memref<8x32xbf16, #tpu.memory_space<vmem>>) attributes {dimension_semantics = [#tpu.dimension_semantics<parallel>, #tpu.dimension_semantics<parallel>], iteration_bounds = array<i64: 2, 1>, scalar_prefetch = 0 : i64, scratch_operands = 1 : i64, tpu.core_type = #tpu.core_type<tc>, window_params = [{transform_indices = @transform_0, window_bounds = array<i64: 1, 8, 32>}, {transform_indices = @transform_1, window_bounds = array<i64: 1, 8, 32>}, {transform_indices = @transform_2, window_bounds = array<i64: 1, 8, 32>}, {transform_indices = @transform_3, window_bounds = array<i64: 1, 8, 8>}, {pipeline_mode = #tpu.pipeline_mode<synchronous>, transform_indices = @transform_4, window_bounds = array<i64: 32, 32>}, {pipeline_mode = #tpu.pipeline_mode<synchronous>, transform_indices = @transform_5, window_bounds = array<i64: 1, 32>}, {pipeline_mode = #tpu.pipeline_mode<synchronous>, transform_indices = @transform_6, window_bounds = array<i64: 32, 32>}, {pipeline_mode = #tpu.pipeline_mode<synchronous>, transform_indices = @transform_7, window_bounds = array<i64: 1, 32>}, {pipeline_mode = #tpu.pipeline_mode<synchronous>, transform_indices = @transform_8, window_bounds = array<i64: 32, 32>}, {pipeline_mode = #tpu.pipeline_mode<synchronous>, transform_indices = @transform_9, window_bounds = array<i64: 1, 32>}, {pipeline_mode = #tpu.pipeline_mode<synchronous>, transform_indices = @transform_10, window_bounds = array<i64: 32, 32>}, {pipeline_mode = #tpu.pipeline_mode<synchronous>, transform_indices = @transform_11, window_bounds = array<i64: 1, 32>}, {transform_indices = @transform_12, window_bounds = array<i64: 1, 8, 32>}, {transform_indices = @transform_13, window_bounds = array<i64: 1, 4, 8, 8>}]} {
    %c0 = arith.constant 0 : index
    %c0_0 = arith.constant 0 : index
    %c0_1 = arith.constant 0 : index
    %0 = vector.load %arg2[%c0, %c0_0, %c0_1] : memref<1x8x32xbf16, #tpu.memory_space<vmem>>, vector<1x8x32xbf16>
    %1 = vector.shape_cast %0 : vector<1x8x32xbf16> to vector<8x32xbf16>
    %c0_2 = arith.constant 0 : index
    %c0_3 = arith.constant 0 : index
    %2 = vector.load %arg6[%c0_2, %c0_3] : memref<32x32xbf16, #tpu.memory_space<vmem>>, vector<32x32xbf16>
    %cst = arith.constant dense<0.000000e+00> : vector<8x32xf32>
    %3 = tpu.matmul %1, %2, %cst {dimension_numbers = #tpu.dot_dimension_numbers<[1], [0], [0], [1], [0, 0, 1, 1], [], []>} : vector<8x32xbf16>, vector<32x32xbf16>, vector<8x32xf32> -> vector<8x32xf32>
    %c0_4 = arith.constant 0 : index
    %c0_5 = arith.constant 0 : index
    %4 = vector.load %arg7[%c0_4, %c0_5] : memref<1x32xf32, #tpu.memory_space<vmem>>, vector<1x32xf32>
    %5 = vector.broadcast %4 : vector<1x32xf32> to vector<8x32xf32>
    %6 = arith.addf %3, %5 : vector<8x32xf32>
    %c0_6 = arith.constant 0 : index
    %c0_7 = arith.constant 0 : index
    %c0_8 = arith.constant 0 : index
    %7 = vector.load %arg3[%c0_6, %c0_7, %c0_8] : memref<1x8x32xbf16, #tpu.memory_space<vmem>>, vector<1x8x32xbf16>
    %8 = vector.shape_cast %7 : vector<1x8x32xbf16> to vector<8x32xbf16>
    %c0_9 = arith.constant 0 : index
    %c0_10 = arith.constant 0 : index
    %9 = vector.load %arg8[%c0_9, %c0_10] : memref<32x32xbf16, #tpu.memory_space<vmem>>, vector<32x32xbf16>
    %cst_11 = arith.constant dense<0.000000e+00> : vector<8x32xf32>
    %10 = tpu.matmul %8, %9, %cst_11 {dimension_numbers = #tpu.dot_dimension_numbers<[1], [0], [0], [1], [0, 0, 1, 1], [], []>} : vector<8x32xbf16>, vector<32x32xbf16>, vector<8x32xf32> -> vector<8x32xf32>
    %c0_12 = arith.constant 0 : index
    %c0_13 = arith.constant 0 : index
    %11 = vector.load %arg9[%c0_12, %c0_13] : memref<1x32xf32, #tpu.memory_space<vmem>>, vector<1x32xf32>
    %12 = vector.broadcast %11 : vector<1x32xf32> to vector<8x32xf32>
    %13 = arith.addf %10, %12 : vector<8x32xf32>
    %c0_14 = arith.constant 0 : index
    %c0_15 = arith.constant 0 : index
    %c0_16 = arith.constant 0 : index
    %14 = vector.load %arg4[%c0_14, %c0_15, %c0_16] : memref<1x8x32xbf16, #tpu.memory_space<vmem>>, vector<1x8x32xbf16>
    %15 = vector.shape_cast %14 : vector<1x8x32xbf16> to vector<8x32xbf16>
    %c0_17 = arith.constant 0 : index
    %c0_18 = arith.constant 0 : index
    %16 = vector.load %arg10[%c0_17, %c0_18] : memref<32x32xbf16, #tpu.memory_space<vmem>>, vector<32x32xbf16>
    %cst_19 = arith.constant dense<0.000000e+00> : vector<8x32xf32>
    %17 = tpu.matmul %15, %16, %cst_19 {dimension_numbers = #tpu.dot_dimension_numbers<[1], [0], [0], [1], [0, 0, 1, 1], [], []>} : vector<8x32xbf16>, vector<32x32xbf16>, vector<8x32xf32> -> vector<8x32xf32>
    %c0_20 = arith.constant 0 : index
    %c0_21 = arith.constant 0 : index
    %18 = vector.load %arg11[%c0_20, %c0_21] : memref<1x32xf32, #tpu.memory_space<vmem>>, vector<1x32xf32>
    %19 = vector.broadcast %18 : vector<1x32xf32> to vector<8x32xf32>
    %20 = arith.addf %17, %19 : vector<8x32xf32>
    %c0_22 = arith.constant 0 : index
    %c0_23 = arith.constant 0 : index
    %c0_24 = arith.constant 0 : index
    %21 = vector.load %arg5[%c0_22, %c0_23, %c0_24] : memref<1x8x8xi32, #tpu.memory_space<vmem>>, vector<1x8x8xi32>
    %22 = vector.shape_cast %21 : vector<1x8x8xi32> to vector<8x8xi32>
    %c0_i32 = arith.constant 0 : i32
    %23 = vector.broadcast %c0_i32 : i32 to vector<8x8xi32>
    %24 = arith.cmpi eq, %22, %23 : vector<8x8xi32>
    %25 = vector.extract_strided_slice %6 {offsets = [0, 0], sizes = [8, 8], strides = [1, 1]} : vector<8x32xf32> to vector<8x8xf32>
    %26 = arith.truncf %25 : vector<8x8xf32> to vector<8x8xbf16>
    %27 = vector.extract_strided_slice %13 {offsets = [0, 0], sizes = [8, 8], strides = [1, 1]} : vector<8x32xf32> to vector<8x8xf32>
    %28 = arith.truncf %27 : vector<8x8xf32> to vector<8x8xbf16>
    %29 = vector.extract_strided_slice %20 {offsets = [0, 0], sizes = [8, 8], strides = [1, 1]} : vector<8x32xf32> to vector<8x8xf32>
    %30 = arith.truncf %29 : vector<8x8xf32> to vector<8x8xbf16>
    %cst_25 = arith.constant dense<0.000000e+00> : vector<8x8xf32>
    %31 = tpu.matmul %26, %28, %cst_25 {dimension_numbers = #tpu.dot_dimension_numbers<[1], [1], [0], [0], [0, 0, 1, 0], [], []>} : vector<8x8xbf16>, vector<8x8xbf16>, vector<8x8xf32> -> vector<8x8xf32>
    %cst_26 = arith.constant 0.353553385 : f32
    %32 = vector.broadcast %cst_26 : f32 to vector<8x8xf32>
    %33 = arith.mulf %31, %32 : vector<8x8xf32>
    %cst_27 = arith.constant 0xFF800000 : f32
    %34 = vector.broadcast %cst_27 : f32 to vector<8x8xf32>
    %35 = arith.select %24, %34, %33 : vector<8x8xi1>, vector<8x8xf32>
    %cst_28 = arith.constant dense<0xFF800000> : vector<8xf32>
    %36 = vector.multi_reduction <maximumf>, %35, %cst_28 [1] : vector<8x8xf32> to vector<8xf32>
    %37 = vector.shape_cast %36 : vector<8xf32> to vector<8x1xf32>
    %38 = vector.broadcast %37 : vector<8x1xf32> to vector<8x8xf32>
    %39 = arith.subf %35, %38 : vector<8x8xf32>
    %40 = math.exp %39 : vector<8x8xf32>
    %cst_29 = arith.constant dense<0.000000e+00> : vector<8xf32>
    %41 = vector.multi_reduction <add>, %40, %cst_29 [1] : vector<8x8xf32> to vector<8xf32>
    %42 = vector.shape_cast %41 : vector<8xf32> to vector<8x1xf32>
    %43 = tpu.reciprocal %42 {approx = true} : vector<8x1xf32> -> vector<8x1xf32>
    %44 = vector.broadcast %43 : vector<8x1xf32> to vector<8x8xf32>
    %45 = arith.mulf %40, %44 : vector<8x8xf32>
    %46 = arith.truncf %45 : vector<8x8xf32> to vector<8x8xbf16>
    %c0_30 = arith.constant 0 : index
    %c0_31 = arith.constant 0 : index
    %c0_32 = arith.constant 0 : index
    %c0_33 = arith.constant 0 : index
    %47 = vector.load %arg15[%c0_30, %c0_31, %c0_32, %c0_33] : memref<1x4x8x8xbf16, #tpu.memory_space<vmem>>, vector<1x1x8x8xbf16>
    %48 = vector.shape_cast %47 : vector<1x1x8x8xbf16> to vector<8x8xbf16>
    %49 = vector.shape_cast %46 : vector<8x8xbf16> to vector<1x1x8x8xbf16>
    tpu.vector_store %arg15[%c0_30, %c0_31, %c0_32, %c0_33], %49 {strides = array<i32>} : memref<1x4x8x8xbf16, #tpu.memory_space<vmem>>, vector<1x1x8x8xbf16>,
    %50 = arith.truncf %45 : vector<8x8xf32> to vector<8x8xbf16>
    %cst_34 = arith.constant dense<0.000000e+00> : vector<8x8xf32>
    %51 = tpu.matmul %50, %30, %cst_34 {dimension_numbers = #tpu.dot_dimension_numbers<[1], [0], [0], [1], [0, 0, 1, 1], [], []>} : vector<8x8xbf16>, vector<8x8xbf16>, vector<8x8xf32> -> vector<8x8xf32>
    %52 = arith.truncf %51 : vector<8x8xf32> to vector<8x8xbf16>
    %c0_35 = arith.constant 0 : index
    %c0_36 = arith.constant 0 : index
    %53 = vector.load %arg16[%c0_35, %c0_36] : memref<8x32xbf16, #tpu.memory_space<vmem>>, vector<8x8xbf16>
    tpu.vector_store %arg16[%c0_35, %c0_36], %52 {strides = array<i32>} : memref<8x32xbf16, #tpu.memory_space<vmem>>, vector<8x8xbf16>,
    %54 = vector.extract_strided_slice %6 {offsets = [0, 8], sizes = [8, 8], strides = [1, 1]} : vector<8x32xf32> to vector<8x8xf32>
    %55 = arith.truncf %54 : vector<8x8xf32> to vector<8x8xbf16>
    %56 = vector.extract_strided_slice %13 {offsets = [0, 8], sizes = [8, 8], strides = [1, 1]} : vector<8x32xf32> to vector<8x8xf32>
    %57 = arith.truncf %56 : vector<8x8xf32> to vector<8x8xbf16>
    %58 = vector.extract_strided_slice %20 {offsets = [0, 8], sizes = [8, 8], strides = [1, 1]} : vector<8x32xf32> to vector<8x8xf32>
    %59 = arith.truncf %58 : vector<8x8xf32> to vector<8x8xbf16>
    %cst_37 = arith.constant dense<0.000000e+00> : vector<8x8xf32>
    %60 = tpu.matmul %55, %57, %cst_37 {dimension_numbers = #tpu.dot_dimension_numbers<[1], [1], [0], [0], [0, 0, 1, 0], [], []>} : vector<8x8xbf16>, vector<8x8xbf16>, vector<8x8xf32> -> vector<8x8xf32>
    %cst_38 = arith.constant 0.353553385 : f32
    %61 = vector.broadcast %cst_38 : f32 to vector<8x8xf32>
    %62 = arith.mulf %60, %61 : vector<8x8xf32>
    %cst_39 = arith.constant 0xFF800000 : f32
    %63 = vector.broadcast %cst_39 : f32 to vector<8x8xf32>
    %64 = arith.select %24, %63, %62 : vector<8x8xi1>, vector<8x8xf32>
    %cst_40 = arith.constant dense<0xFF800000> : vector<8xf32>
    %65 = vector.multi_reduction <maximumf>, %64, %cst_40 [1] : vector<8x8xf32> to vector<8xf32>
    %66 = vector.shape_cast %65 : vector<8xf32> to vector<8x1xf32>
    %67 = vector.broadcast %66 : vector<8x1xf32> to vector<8x8xf32>
    %68 = arith.subf %64, %67 : vector<8x8xf32>
    %69 = math.exp %68 : vector<8x8xf32>
    %cst_41 = arith.constant dense<0.000000e+00> : vector<8xf32>
    %70 = vector.multi_reduction <add>, %69, %cst_41 [1] : vector<8x8xf32> to vector<8xf32>
    %71 = vector.shape_cast %70 : vector<8xf32> to vector<8x1xf32>
    %72 = tpu.reciprocal %71 {approx = true} : vector<8x1xf32> -> vector<8x1xf32>
    %73 = vector.broadcast %72 : vector<8x1xf32> to vector<8x8xf32>
    %74 = arith.mulf %69, %73 : vector<8x8xf32>
    %75 = arith.truncf %74 : vector<8x8xf32> to vector<8x8xbf16>
    %c0_42 = arith.constant 0 : index
    %c1 = arith.constant 1 : index
    %c0_43 = arith.constant 0 : index
    %c0_44 = arith.constant 0 : index
    %76 = vector.load %arg15[%c0_42, %c1, %c0_43, %c0_44] : memref<1x4x8x8xbf16, #tpu.memory_space<vmem>>, vector<1x1x8x8xbf16>
    %77 = vector.shape_cast %76 : vector<1x1x8x8xbf16> to vector<8x8xbf16>
    %78 = vector.shape_cast %75 : vector<8x8xbf16> to vector<1x1x8x8xbf16>
    tpu.vector_store %arg15[%c0_42, %c1, %c0_43, %c0_44], %78 {strides = array<i32>} : memref<1x4x8x8xbf16, #tpu.memory_space<vmem>>, vector<1x1x8x8xbf16>,
    %79 = arith.truncf %74 : vector<8x8xf32> to vector<8x8xbf16>
    %cst_45 = arith.constant dense<0.000000e+00> : vector<8x8xf32>
    %80 = tpu.matmul %79, %59, %cst_45 {dimension_numbers = #tpu.dot_dimension_numbers<[1], [0], [0], [1], [0, 0, 1, 1], [], []>} : vector<8x8xbf16>, vector<8x8xbf16>, vector<8x8xf32> -> vector<8x8xf32>
    %81 = arith.truncf %80 : vector<8x8xf32> to vector<8x8xbf16>
    %c0_46 = arith.constant 0 : index
    %c8 = arith.constant 8 : index
    %82 = vector.load %arg16[%c0_46, %c8] : memref<8x32xbf16, #tpu.memory_space<vmem>>, vector<8x8xbf16>
    tpu.vector_store %arg16[%c0_46, %c8], %81 {strides = array<i32>} : memref<8x32xbf16, #tpu.memory_space<vmem>>, vector<8x8xbf16>,
    %83 = vector.extract_strided_slice %6 {offsets = [0, 16], sizes = [8, 8], strides = [1, 1]} : vector<8x32xf32> to vector<8x8xf32>
    %84 = arith.truncf %83 : vector<8x8xf32> to vector<8x8xbf16>
    %85 = vector.extract_strided_slice %13 {offsets = [0, 16], sizes = [8, 8], strides = [1, 1]} : vector<8x32xf32> to vector<8x8xf32>
    %86 = arith.truncf %85 : vector<8x8xf32> to vector<8x8xbf16>
    %87 = vector.extract_strided_slice %20 {offsets = [0, 16], sizes = [8, 8], strides = [1, 1]} : vector<8x32xf32> to vector<8x8xf32>
    %88 = arith.truncf %87 : vector<8x8xf32> to vector<8x8xbf16>
    %cst_47 = arith.constant dense<0.000000e+00> : vector<8x8xf32>
    %89 = tpu.matmul %84, %86, %cst_47 {dimension_numbers = #tpu.dot_dimension_numbers<[1], [1], [0], [0], [0, 0, 1, 0], [], []>} : vector<8x8xbf16>, vector<8x8xbf16>, vector<8x8xf32> -> vector<8x8xf32>
    %cst_48 = arith.constant 0.353553385 : f32
    %90 = vector.broadcast %cst_48 : f32 to vector<8x8xf32>
    %91 = arith.mulf %89, %90 : vector<8x8xf32>
    %cst_49 = arith.constant 0xFF800000 : f32
    %92 = vector.broadcast %cst_49 : f32 to vector<8x8xf32>
    %93 = arith.select %24, %92, %91 : vector<8x8xi1>, vector<8x8xf32>
    %cst_50 = arith.constant dense<0xFF800000> : vector<8xf32>
    %94 = vector.multi_reduction <maximumf>, %93, %cst_50 [1] : vector<8x8xf32> to vector<8xf32>
    %95 = vector.shape_cast %94 : vector<8xf32> to vector<8x1xf32>
    %96 = vector.broadcast %95 : vector<8x1xf32> to vector<8x8xf32>
    %97 = arith.subf %93, %96 : vector<8x8xf32>
    %98 = math.exp %97 : vector<8x8xf32>
    %cst_51 = arith.constant dense<0.000000e+00> : vector<8xf32>
    %99 = vector.multi_reduction <add>, %98, %cst_51 [1] : vector<8x8xf32> to vector<8xf32>
    %100 = vector.shape_cast %99 : vector<8xf32> to vector<8x1xf32>
    %101 = tpu.reciprocal %100 {approx = true} : vector<8x1xf32> -> vector<8x1xf32>
    %102 = vector.broadcast %101 : vector<8x1xf32> to vector<8x8xf32>
    %103 = arith.mulf %98, %102 : vector<8x8xf32>
    %104 = arith.truncf %103 : vector<8x8xf32> to vector<8x8xbf16>
    %c0_52 = arith.constant 0 : index
    %c2 = arith.constant 2 : index
    %c0_53 = arith.constant 0 : index
    %c0_54 = arith.constant 0 : index
    %105 = vector.load %arg15[%c0_52, %c2, %c0_53, %c0_54] : memref<1x4x8x8xbf16, #tpu.memory_space<vmem>>, vector<1x1x8x8xbf16>
    %106 = vector.shape_cast %105 : vector<1x1x8x8xbf16> to vector<8x8xbf16>
    %107 = vector.shape_cast %104 : vector<8x8xbf16> to vector<1x1x8x8xbf16>
    tpu.vector_store %arg15[%c0_52, %c2, %c0_53, %c0_54], %107 {strides = array<i32>} : memref<1x4x8x8xbf16, #tpu.memory_space<vmem>>, vector<1x1x8x8xbf16>,
    %108 = arith.truncf %103 : vector<8x8xf32> to vector<8x8xbf16>
    %cst_55 = arith.constant dense<0.000000e+00> : vector<8x8xf32>
    %109 = tpu.matmul %108, %88, %cst_55 {dimension_numbers = #tpu.dot_dimension_numbers<[1], [0], [0], [1], [0, 0, 1, 1], [], []>} : vector<8x8xbf16>, vector<8x8xbf16>, vector<8x8xf32> -> vector<8x8xf32>
    %110 = arith.truncf %109 : vector<8x8xf32> to vector<8x8xbf16>
    %c0_56 = arith.constant 0 : index
    %c16 = arith.constant 16 : index
    %111 = vector.load %arg16[%c0_56, %c16] : memref<8x32xbf16, #tpu.memory_space<vmem>>, vector<8x8xbf16>
    tpu.vector_store %arg16[%c0_56, %c16], %110 {strides = array<i32>} : memref<8x32xbf16, #tpu.memory_space<vmem>>, vector<8x8xbf16>,
    %112 = vector.extract_strided_slice %6 {offsets = [0, 24], sizes = [8, 8], strides = [1, 1]} : vector<8x32xf32> to vector<8x8xf32>
    %113 = arith.truncf %112 : vector<8x8xf32> to vector<8x8xbf16>
    %114 = vector.extract_strided_slice %13 {offsets = [0, 24], sizes = [8, 8], strides = [1, 1]} : vector<8x32xf32> to vector<8x8xf32>
    %115 = arith.truncf %114 : vector<8x8xf32> to vector<8x8xbf16>
    %116 = vector.extract_strided_slice %20 {offsets = [0, 24], sizes = [8, 8], strides = [1, 1]} : vector<8x32xf32> to vector<8x8xf32>
    %117 = arith.truncf %116 : vector<8x8xf32> to vector<8x8xbf16>
    %cst_57 = arith.constant dense<0.000000e+00> : vector<8x8xf32>
    %118 = tpu.matmul %113, %115, %cst_57 {dimension_numbers = #tpu.dot_dimension_numbers<[1], [1], [0], [0], [0, 0, 1, 0], [], []>} : vector<8x8xbf16>, vector<8x8xbf16>, vector<8x8xf32> -> vector<8x8xf32>
    %cst_58 = arith.constant 0.353553385 : f32
    %119 = vector.broadcast %cst_58 : f32 to vector<8x8xf32>
    %120 = arith.mulf %118, %119 : vector<8x8xf32>
    %cst_59 = arith.constant 0xFF800000 : f32
    %121 = vector.broadcast %cst_59 : f32 to vector<8x8xf32>
    %122 = arith.select %24, %121, %120 : vector<8x8xi1>, vector<8x8xf32>
    %cst_60 = arith.constant dense<0xFF800000> : vector<8xf32>
    %123 = vector.multi_reduction <maximumf>, %122, %cst_60 [1] : vector<8x8xf32> to vector<8xf32>
    %124 = vector.shape_cast %123 : vector<8xf32> to vector<8x1xf32>
    %125 = vector.broadcast %124 : vector<8x1xf32> to vector<8x8xf32>
    %126 = arith.subf %122, %125 : vector<8x8xf32>
    %127 = math.exp %126 : vector<8x8xf32>
    %cst_61 = arith.constant dense<0.000000e+00> : vector<8xf32>
    %128 = vector.multi_reduction <add>, %127, %cst_61 [1] : vector<8x8xf32> to vector<8xf32>
    %129 = vector.shape_cast %128 : vector<8xf32> to vector<8x1xf32>
    %130 = tpu.reciprocal %129 {approx = true} : vector<8x1xf32> -> vector<8x1xf32>
    %131 = vector.broadcast %130 : vector<8x1xf32> to vector<8x8xf32>
    %132 = arith.mulf %127, %131 : vector<8x8xf32>
    %133 = arith.truncf %132 : vector<8x8xf32> to vector<8x8xbf16>
    %c0_62 = arith.constant 0 : index
    %c3 = arith.constant 3 : index
    %c0_63 = arith.constant 0 : index
    %c0_64 = arith.constant 0 : index
    %134 = vector.load %arg15[%c0_62, %c3, %c0_63, %c0_64] : memref<1x4x8x8xbf16, #tpu.memory_space<vmem>>, vector<1x1x8x8xbf16>
    %135 = vector.shape_cast %134 : vector<1x1x8x8xbf16> to vector<8x8xbf16>
    %136 = vector.shape_cast %133 : vector<8x8xbf16> to vector<1x1x8x8xbf16>
    tpu.vector_store %arg15[%c0_62, %c3, %c0_63, %c0_64], %136 {strides = array<i32>} : memref<1x4x8x8xbf16, #tpu.memory_space<vmem>>, vector<1x1x8x8xbf16>,
    %137 = arith.truncf %132 : vector<8x8xf32> to vector<8x8xbf16>
    %cst_65 = arith.constant dense<0.000000e+00> : vector<8x8xf32>
    %138 = tpu.matmul %137, %117, %cst_65 {dimension_numbers = #tpu.dot_dimension_numbers<[1], [0], [0], [1], [0, 0, 1, 1], [], []>} : vector<8x8xbf16>, vector<8x8xbf16>, vector<8x8xf32> -> vector<8x8xf32>
    %139 = arith.truncf %138 : vector<8x8xf32> to vector<8x8xbf16>
    %c0_66 = arith.constant 0 : index
    %c24 = arith.constant 24 : index
    %140 = vector.load %arg16[%c0_66, %c24] : memref<8x32xbf16, #tpu.memory_space<vmem>>, vector<8x8xbf16>
    tpu.vector_store %arg16[%c0_66, %c24], %139 {strides = array<i32>} : memref<8x32xbf16, #tpu.memory_space<vmem>>, vector<8x8xbf16>,
    %c0_67 = arith.constant 0 : index
    %c0_68 = arith.constant 0 : index
    %141 = vector.load %arg16[%c0_67, %c0_68] : memref<8x32xbf16, #tpu.memory_space<vmem>>, vector<8x32xbf16>
    %c0_69 = arith.constant 0 : index
    %c0_70 = arith.constant 0 : index
    %142 = vector.load %arg12[%c0_69, %c0_70] : memref<32x32xbf16, #tpu.memory_space<vmem>>, vector<32x32xbf16>
    %cst_71 = arith.constant dense<0.000000e+00> : vector<8x32xf32>
    %143 = tpu.matmul %141, %142, %cst_71 {dimension_numbers = #tpu.dot_dimension_numbers<[1], [0], [0], [1], [0, 0, 1, 1], [], []>} : vector<8x32xbf16>, vector<32x32xbf16>, vector<8x32xf32> -> vector<8x32xf32>
    %c0_72 = arith.constant 0 : index
    %c0_73 = arith.constant 0 : index
    %144 = vector.load %arg13[%c0_72, %c0_73] : memref<1x32xf32, #tpu.memory_space<vmem>>, vector<1x32xf32>
    %145 = vector.broadcast %144 : vector<1x32xf32> to vector<8x32xf32>
    %146 = arith.addf %143, %145 : vector<8x32xf32>
    %147 = arith.truncf %146 : vector<8x32xf32> to vector<8x32xbf16>
    %c0_74 = arith.constant 0 : index
    %c0_75 = arith.constant 0 : index
    %c0_76 = arith.constant 0 : index
    %148 = vector.load %arg14[%c0_74, %c0_75, %c0_76] : memref<1x8x32xbf16, #tpu.memory_space<vmem>>, vector<1x8x32xbf16>
    %149 = vector.shape_cast %148 : vector<1x8x32xbf16> to vector<8x32xbf16>
    %150 = vector.shape_cast %147 : vector<8x32xbf16> to vector<1x8x32xbf16>
    tpu.vector_store %arg14[%c0_74, %c0_75, %c0_76], %150 {strides = array<i32>} : memref<1x8x32xbf16, #tpu.memory_space<vmem>>, vector<1x8x32xbf16>,
    return
  }
  func.func @transform_0(%arg0: i32, %arg1: i32) -> (i32, i32, i32) {
    %c0_i32 = arith.constant 0 : i32
    %c0_i32_0 = arith.constant 0 : i32
    return %arg0, %arg1, %c0_i32 : i32, i32, i32
  }
  func.func @transform_1(%arg0: i32, %arg1: i32) -> (i32, i32, i32) {
    %c0_i32 = arith.constant 0 : i32
    %c0_i32_0 = arith.constant 0 : i32
    %c0_i32_1 = arith.constant 0 : i32
    return %arg0, %c0_i32, %c0_i32_0 : i32, i32, i32
  }
  func.func @transform_2(%arg0: i32, %arg1: i32) -> (i32, i32, i32) {
    %c0_i32 = arith.constant 0 : i32
    %c0_i32_0 = arith.constant 0 : i32
    %c0_i32_1 = arith.constant 0 : i32
    return %arg0, %c0_i32, %c0_i32_0 : i32, i32, i32
  }
  func.func @transform_3(%arg0: i32, %arg1: i32) -> (i32, i32, i32) {
    %c0_i32 = arith.constant 0 : i32
    %c0_i32_0 = arith.constant 0 : i32
    %c0_i32_1 = arith.constant 0 : i32
    return %c0_i32, %arg1, %c0_i32_0 : i32, i32, i32
  }
  func.func @transform_4(%arg0: i32, %arg1: i32) -> (i32, i32) {
    %c0_i32 = arith.constant 0 : i32
    %c0_i32_0 = arith.constant 0 : i32
    %c0_i32_1 = arith.constant 0 : i32
    return %c0_i32, %c0_i32_0 : i32, i32
  }
  func.func @transform_5(%arg0: i32, %arg1: i32) -> (i32, i32) {
    %c0_i32 = arith.constant 0 : i32
    %c0_i32_0 = arith.constant 0 : i32
    %c0_i32_1 = arith.constant 0 : i32
    return %c0_i32, %c0_i32_0 : i32, i32
  }
  func.func @transform_6(%arg0: i32, %arg1: i32) -> (i32, i32) {
    %c0_i32 = arith.constant 0 : i32
    %c0_i32_0 = arith.constant 0 : i32
    %c0_i32_1 = arith.constant 0 : i32
    return %c0_i32, %c0_i32_0 : i32, i32
  }
  func.func @transform_7(%arg0: i32, %arg1: i32) -> (i32, i32) {
    %c0_i32 = arith.constant 0 : i32
    %c0_i32_0 = arith.constant 0 : i32
    %c0_i32_1 = arith.constant 0 : i32
    return %c0_i32, %c0_i32_0 : i32, i32
  }
  func.func @transform_8(%arg0: i32, %arg1: i32) -> (i32, i32) {
    %c0_i32 = arith.constant 0 : i32
    %c0_i32_0 = arith.constant 0 : i32
    %c0_i32_1 = arith.constant 0 : i32
    return %c0_i32, %c0_i32_0 : i32, i32
  }
  func.func @transform_9(%arg0: i32, %arg1: i32) -> (i32, i32) {
    %c0_i32 = arith.constant 0 : i32
    %c0_i32_0 = arith.constant 0 : i32
    %c0_i32_1 = arith.constant 0 : i32
    return %c0_i32, %c0_i32_0 : i32, i32
  }
  func.func @transform_10(%arg0: i32, %arg1: i32) -> (i32, i32) {
    %c0_i32 = arith.constant 0 : i32
    %c0_i32_0 = arith.constant 0 : i32
    %c0_i32_1 = arith.constant 0 : i32
    return %c0_i32, %c0_i32_0 : i32, i32
  }
  func.func @transform_11(%arg0: i32, %arg1: i32) -> (i32, i32) {
    %c0_i32 = arith.constant 0 : i32
    %c0_i32_0 = arith.constant 0 : i32
    %c0_i32_1 = arith.constant 0 : i32
    return %c0_i32, %c0_i32_0 : i32, i32
  }
  func.func @transform_12(%arg0: i32, %arg1: i32) -> (i32, i32, i32) {
    %c0_i32 = arith.constant 0 : i32
    %c0_i32_0 = arith.constant 0 : i32
    return %arg0, %arg1, %c0_i32 : i32, i32, i32
  }
  func.func @transform_13(%arg0: i32, %arg1: i32) -> (i32, i32, i32, i32) {
    %c0_i32 = arith.constant 0 : i32
    %c0_i32_0 = arith.constant 0 : i32
    %c0_i32_1 = arith.constant 0 : i32
    return %arg0, %c0_i32, %arg1, %c0_i32_0 : i32, i32, i32, i32
  }
}

</mosaic_0001>

<llo_original>
// kernel: tpu_custom_call.1
$region0: #{tpu_custom_call.1}
  #allocation0 [shape = 'u32[]', space=smem, size = 0x4, offset = 0x4, fixed_abs, tag = 'smem constant byte address 0x4 - core index']
  #allocation1 [shape = 'u32[144,128]{1,0:T(1,128)}', space=vmem, size = 0x12000, scoped, tag = 'internal scratch']
  #allocation2 [shape = 'bf16[8,32]{1,0:T(8,128)(2,1)}', space=vmem, size = 0x800, scoped, tag = 'scratch operand']
  %s0 = inlined_call_operand.hbm [shape: bf16[2,8,32], index: 0, kind: input, shape index: {}]
  %s1 = inlined_call_operand.hbm [shape: bf16[2,8,32], index: 1, kind: input, shape index: {}]
  %s2 = inlined_call_operand.hbm [shape: bf16[2,8,32], index: 2, kind: input, shape index: {}]
  %s3 = inlined_call_operand.hbm [shape: s32[1,8,8], index: 3, kind: input, shape index: {}]
  %s4 = inlined_call_operand.hbm [shape: bf16[32,32], index: 4, kind: input, shape index: {}]
  %s5 = inlined_call_operand.vmem [shape: f32[1,32], index: 5, kind: input, shape index: {}]
  %s6 = inlined_call_operand.vmem [shape: bf16[32,32], index: 6, kind: input, shape index: {}]
  %s7 = inlined_call_operand.vmem [shape: f32[1,32], index: 7, kind: input, shape index: {}]
  %s8 = inlined_call_operand.hbm [shape: bf16[32,32], index: 8, kind: input, shape index: {}]
  %s9 = inlined_call_operand.hbm [shape: f32[1,32], index: 9, kind: input, shape index: {}]
  %s10 = inlined_call_operand.vmem [shape: bf16[32,32], index: 10, kind: input, shape index: {}]
  %s11 = inlined_call_operand.vmem [shape: f32[1,32], index: 11, kind: input, shape index: {}]
  %s12 = inlined_call_operand.hbm [shape: bf16[2,8,32], index: 12, kind: output, shape index: {0}]
  %s13 = inlined_call_operand.hbm [shape: bf16[2,4,8,8], index: 13, kind: output, shape index: {1}]
  %14 = xla_tuple %s12, %s13
  %s15 = sld [smem:[#allocation0]]
  $region117: #{tpu_custom_call.1} parent=0
    _
  %s17 = ssub.s32 1, %s15
  %s18 = scalar_select 0, %s17, %s15
  $region1: #{tpu_custom_call.1} parent=0
    #allocation3 [shape = 'u8[4096]{0}', space=vmem, size = 0x1000, scoped, tag = 'input window, operand 0']
    #allocation4 [shape = 's32[2]{0}', space=sflag, size = 0x8, scoped, tag = 'scoped memory for tpu_custom_call.1']
    #allocation5 [shape = 's32[2]{0}', space=sflag, size = 0x8, scoped, tag = 'scoped memory for tpu_custom_call.1']
    #allocation6 [shape = 'u8[4096]{0}', space=vmem, size = 0x1000, scoped, tag = 'input window, operand 1']
    #allocation7 [shape = 's32[2]{0}', space=sflag, size = 0x8, scoped, tag = 'scoped memory for tpu_custom_call.1']
    #allocation8 [shape = 'u8[4096]{0}', space=vmem, size = 0x1000, scoped, tag = 'input window, operand 2']
    #allocation9 [shape = 'u8[4096]{0}', space=vmem, size = 0x1000, scoped, tag = 'input window, operand 3, single buffered']
    #allocation10 [shape = 's32[1]{0}', space=sflag, size = 0x4, scoped, tag = 'scoped memory for tpu_custom_call.1']
    #allocation11 [shape = 'u8[8192]{0}', space=vmem, size = 0x2000, scoped, tag = 'input window, operand 4, single buffered']
    #allocation12 [shape = 'u8[8192]{0}', space=vmem, size = 0x2000, scoped, tag = 'input window, operand 8, single buffered']
    #allocation13 [shape = 's32[1]{0}', space=sflag, size = 0x4, scoped, tag = 'scoped memory for tpu_custom_call.1']
    #allocation14 [shape = 'u8[512]{0}', space=vmem, size = 0x400, scoped, tag = 'input window, operand 9, single buffered']
    #allocation15 [shape = 'u8[4096]{0}', space=vmem, size = 0x1000, scoped, tag = 'output window, operand 0']
    #allocation16 [shape = 'u8[16384]{0}', space=vmem, size = 0x4000, scoped, tag = 'output window, operand 1']
    #allocation17 [shape = 's32[2]{0}', space=sflag, size = 0x8, scoped, tag = 'scoped memory for tpu_custom_call.1']
    %19 = vsyncpa [#allocation4], 0
    %s20 = scalar_lea.sflag [#allocation4], 1
    %21 = vsyncpa %s20, 0
    %22 = vsyncpa [#allocation7], 0
    %s23 = scalar_lea.sflag [#allocation7], 1
    %24 = vsyncpa %s23, 0
    %25 = vsyncpa [#allocation10], 0
    %26 = vsyncpa [#allocation13], 0
    %27 = vsyncpa [#allocation5], 0
    %s28 = scalar_lea.sflag [#allocation5], 1
    %29 = vsyncpa %s28, 0
    %30 = vsyncpa [#allocation17], 0
    %s31 = scalar_lea.sflag [#allocation17], 1
    %32 = vsyncpa %s31, 0
    loop: start=0, step=1, limit=4
    $region2: #{tpu_custom_call.1} parent=1 // loop_pre_header
      _
    $region3: #{tpu_custom_call.1} parent=1 // loop_header
      %s34 = sphi 0, %s38
      %p35 = scmp.ge.s32.totalorder %s34, 4
      %s41 = sphi 0, %s53
      %s42 = sphi 0, %s49
      %s43 = sphi 0, %s41
      %s44 = sphi 0, %s42
      %s45 = sphi 0, %s43
      %s46 = sphi 0, %s44
      %s58 = sphi 0, %s60
      %s61 = sphi 0, %s58
      %s62 = sphi 0, %s61
      %s78 = sphi 0, %s62
      %s84 = sphi 0, %s86
      %s87 = sphi 0, %s84
      %s88 = sphi 0, %s87
      %s104 = sphi 0, %s88
      %s110 = sphi 0, %s112
      %s113 = sphi 0, %s110
      %s114 = sphi 0, %s113
      %s130 = sphi 0, %s114
      %s136 = sphi 0, %s138
      %s139 = sphi 0, %s136
      %s140 = sphi 0, %s139
      %s156 = sphi 0, %s140
      %s160 = sphi 0, %s160
      %s162 = sphi 0, %s160
      %s163 = sphi 0, %s162
      %s177 = sphi 0, %s163
      %s181 = sphi 0, %s181
      %s183 = sphi 0, %s181
      %s184 = sphi 0, %s183
      %s198 = sphi 0, %s184
      %s202 = sphi 0, %s202
      %s204 = sphi 0, %s202
      %s205 = sphi 0, %s204
      %s219 = sphi 0, %s205
      %s223 = sphi 0, %s223
      %s225 = sphi 0, %s223
      %s226 = sphi 0, %s225
      %s240 = sphi 0, %s226
      %s244 = sphi 0, %s244
      %s246 = sphi 0, %s244
      %s247 = sphi 0, %s246
      %s261 = sphi 0, %s247
      %s265 = sphi 0, %s265
      %s267 = sphi 0, %s265
      %s268 = sphi 0, %s267
      %s282 = sphi 0, %s268
      %s286 = sphi 0, %s286
      %s288 = sphi 0, %s286
      %s289 = sphi 0, %s288
      %s303 = sphi 0, %s289
      %s307 = sphi 0, %s307
      %s309 = sphi 0, %s307
      %s310 = sphi 0, %s309
      %s324 = sphi 0, %s310
      %s332 = sphi 0, %s334
      %s335 = sphi 0, %s332
      %s336 = sphi 0, %s335
      %s352 = sphi 0, %s336
      %s360 = sphi 0, %s362
      %s363 = sphi 0, %s360
      %s364 = sphi 0, %s363
      %s380 = sphi 0, %s364
    $region4: #{tpu_custom_call.1} parent=1 // loop_header_branch
      %37 = sbr.rel (%p35) target = $region8
    $region5: #{tpu_custom_call.1} parent=1 // loop_body
      %s39 = ssub.s32 %s34, 1
      %s40 = ssub.s32 %s34, 2
      %s47 = sadd.s32 1, %s42
      %p48 = scmp.ge.s32.totalorder %s47, 1
      %s49 = scalar_select %p48, 0, %s47
      %s50 = sadd.s32 1, %s41
      %s51 = scalar_select %p48, %s50, %s41
      %p52 = scmp.ge.s32.totalorder %s51, 2
      %s53 = scalar_select %p52, 0, %s51
      %s54 = ssub.s32 %s41, %s53
      %s55 = ssub.s32 %s42, %s49
      %s56 = sor.u32 %s54, %s55
      %p57 = scmp.eq.s32.totalorder %s56, 0
      %s59 = sadd.s32 %s58, 1
      %s60 = scalar_select %p57, %s58, %s59
      %p63 = pneg %p57
      %p64 = scmp.eq.s32.totalorder %s34, 1
      %p65 = por %p63, %p64
      %p66 = scmp.ne.s32.totalorder %s58, %s61
      %p67 = scmp.eq.s32.totalorder %s34, 0
      %p68 = por %p66, %p67
      %p69 = scmp.ne.s32.totalorder %s58, %s61
      %p70 = scmp.eq.s32.totalorder %s39, 1
      %p71 = por %p69, %p70
      %p72 = scmp.ne.s32.totalorder %s61, %s62
      %p73 = scmp.eq.s32.totalorder %s39, 0
      %p74 = por %p72, %p73
      %p75 = scmp.ne.s32.totalorder %s61, %s62
      %p76 = scmp.eq.s32.totalorder %s40, 1
      %p77 = por %p75, %p76
      %p79 = scmp.ne.s32.totalorder %s62, %s78
      %p80 = scmp.eq.s32.totalorder %s40, 0
      %p81 = por %p79, %p80
      %s82 = ssub.s32 %s41, %s53
      %p83 = scmp.eq.s32.totalorder %s82, 0
      %s85 = sadd.s32 %s84, 1
      %s86 = scalar_select %p83, %s84, %s85
      %p89 = pneg %p83
      %p90 = scmp.eq.s32.totalorder %s34, 1
      %p91 = por %p89, %p90
      %p92 = scmp.ne.s32.totalorder %s84, %s87
      %p93 = scmp.eq.s32.totalorder %s34, 0
      %p94 = por %p92, %p93
      %p95 = scmp.ne.s32.totalorder %s84, %s87
      %p96 = scmp.eq.s32.totalorder %s39, 1
      %p97 = por %p95, %p96
      %p98 = scmp.ne.s32.totalorder %s87, %s88
      %p99 = scmp.eq.s32.totalorder %s39, 0
      %p100 = por %p98, %p99
      %p101 = scmp.ne.s32.totalorder %s87, %s88
      %p102 = scmp.eq.s32.totalorder %s40, 1
      %p103 = por %p101, %p102
      %p105 = scmp.ne.s32.totalorder %s88, %s104
      %p106 = scmp.eq.s32.totalorder %s40, 0
      %p107 = por %p105, %p106
      %s108 = ssub.s32 %s41, %s53
      %p109 = scmp.eq.s32.totalorder %s108, 0
      %s111 = sadd.s32 %s110, 1
      %s112 = scalar_select %p109, %s110, %s111
      %p115 = pneg %p109
      %p116 = scmp.eq.s32.totalorder %s34, 1
      %p117 = por %p115, %p116
      %p118 = scmp.ne.s32.totalorder %s110, %s113
      %p119 = scmp.eq.s32.totalorder %s34, 0
      %p120 = por %p118, %p119
      %p121 = scmp.ne.s32.totalorder %s110, %s113
      %p122 = scmp.eq.s32.totalorder %s39, 1
      %p123 = por %p121, %p122
      %p124 = scmp.ne.s32.totalorder %s113, %s114
      %p125 = scmp.eq.s32.totalorder %s39, 0
      %p126 = por %p124, %p125
      %p127 = scmp.ne.s32.totalorder %s113, %s114
      %p128 = scmp.eq.s32.totalorder %s40, 1
      %p129 = por %p127, %p128
      %p131 = scmp.ne.s32.totalorder %s114, %s130
      %p132 = scmp.eq.s32.totalorder %s40, 0
      %p133 = por %p131, %p132
      %s134 = ssub.s32 %s42, %s49
      %p135 = scmp.eq.s32.totalorder %s134, 0
      %s137 = sadd.s32 %s136, 1
      %s138 = scalar_select %p135, %s136, %s137
      %p141 = pneg %p135
      %p142 = scmp.eq.s32.totalorder %s34, 1
      %p143 = por %p141, %p142
      %p144 = scmp.ne.s32.totalorder %s136, %s139
      %p145 = scmp.eq.s32.totalorder %s34, 0
      %p146 = por %p144, %p145
      %p147 = scmp.ne.s32.totalorder %s136, %s139
      %p148 = scmp.eq.s32.totalorder %s39, 1
      %p149 = por %p147, %p148
      %p150 = scmp.ne.s32.totalorder %s139, %s140
      %p151 = scmp.eq.s32.totalorder %s39, 0
      %p152 = por %p150, %p151
      %p153 = scmp.ne.s32.totalorder %s139, %s140
      %p154 = scmp.eq.s32.totalorder %s40, 1
      %p155 = por %p153, %p154
      %p157 = scmp.ne.s32.totalorder %s140, %s156
      %p158 = scmp.eq.s32.totalorder %s40, 0
      %p159 = por %p157, %p158
      %s161 = sadd.s32 %s160, 1
      %p164 = scmp.eq.s32.totalorder %s34, 1
      %p165 = scmp.ne.s32.totalorder %s160, %s162
      %p166 = scmp.eq.s32.totalorder %s34, 0
      %p167 = por %p165, %p166
      %p168 = scmp.ne.s32.totalorder %s160, %s162
      %p169 = scmp.eq.s32.totalorder %s39, 1
      %p170 = por %p168, %p169
      %p171 = scmp.ne.s32.totalorder %s162, %s163
      %p172 = scmp.eq.s32.totalorder %s39, 0
      %p173 = por %p171, %p172
      %p174 = scmp.ne.s32.totalorder %s162, %s163
      %p175 = scmp.eq.s32.totalorder %s40, 1
      %p176 = por %p174, %p175
      %p178 = scmp.ne.s32.totalorder %s163, %s177
      %p179 = scmp.eq.s32.totalorder %s40, 0
      %p180 = por %p178, %p179
      %s182 = sadd.s32 %s181, 1
      %p185 = scmp.eq.s32.totalorder %s34, 1
      %p186 = scmp.ne.s32.totalorder %s181, %s183
      %p187 = scmp.eq.s32.totalorder %s34, 0
      %p188 = por %p186, %p187
      %p189 = scmp.ne.s32.totalorder %s181, %s183
      %p190 = scmp.eq.s32.totalorder %s39, 1
      %p191 = por %p189, %p190
      %p192 = scmp.ne.s32.totalorder %s183, %s184
      %p193 = scmp.eq.s32.totalorder %s39, 0
      %p194 = por %p192, %p193
      %p195 = scmp.ne.s32.totalorder %s183, %s184
      %p196 = scmp.eq.s32.totalorder %s40, 1
      %p197 = por %p195, %p196
      %p199 = scmp.ne.s32.totalorder %s184, %s198
      %p200 = scmp.eq.s32.totalorder %s40, 0
      %p201 = por %p199, %p200
      %s203 = sadd.s32 %s202, 1
      %p206 = scmp.eq.s32.totalorder %s34, 1
      %p207 = scmp.ne.s32.totalorder %s202, %s204
      %p208 = scmp.eq.s32.totalorder %s34, 0
      %p209 = por %p207, %p208
      %p210 = scmp.ne.s32.totalorder %s202, %s204
      %p211 = scmp.eq.s32.totalorder %s39, 1
      %p212 = por %p210, %p211
      %p213 = scmp.ne.s32.totalorder %s204, %s205
      %p214 = scmp.eq.s32.totalorder %s39, 0
      %p215 = por %p213, %p214
      %p216 = scmp.ne.s32.totalorder %s204, %s205
      %p217 = scmp.eq.s32.totalorder %s40, 1
      %p218 = por %p216, %p217
      %p220 = scmp.ne.s32.totalorder %s205, %s219
      %p221 = scmp.eq.s32.totalorder %s40, 0
      %p222 = por %p220, %p221
      %s224 = sadd.s32 %s223, 1
      %p227 = scmp.eq.s32.totalorder %s34, 1
      %p228 = scmp.ne.s32.totalorder %s223, %s225
      %p229 = scmp.eq.s32.totalorder %s34, 0
      %p230 = por %p228, %p229
      %p231 = scmp.ne.s32.totalorder %s223, %s225
      %p232 = scmp.eq.s32.totalorder %s39, 1
      %p233 = por %p231, %p232
      %p234 = scmp.ne.s32.totalorder %s225, %s226
      %p235 = scmp.eq.s32.totalorder %s39, 0
      %p236 = por %p234, %p235
      %p237 = scmp.ne.s32.totalorder %s225, %s226
      %p238 = scmp.eq.s32.totalorder %s40, 1
      %p239 = por %p237, %p238
      %p241 = scmp.ne.s32.totalorder %s226, %s240
      %p242 = scmp.eq.s32.totalorder %s40, 0
      %p243 = por %p241, %p242
      %s245 = sadd.s32 %s244, 1
      %p248 = scmp.eq.s32.totalorder %s34, 1
      %p249 = scmp.ne.s32.totalorder %s244, %s246
      %p250 = scmp.eq.s32.totalorder %s34, 0
      %p251 = por %p249, %p250
      %p252 = scmp.ne.s32.totalorder %s244, %s246
      %p253 = scmp.eq.s32.totalorder %s39, 1
      %p254 = por %p252, %p253
      %p255 = scmp.ne.s32.totalorder %s246, %s247
      %p256 = scmp.eq.s32.totalorder %s39, 0
      %p257 = por %p255, %p256
      %p258 = scmp.ne.s32.totalorder %s246, %s247
      %p259 = scmp.eq.s32.totalorder %s40, 1
      %p260 = por %p258, %p259
      %p262 = scmp.ne.s32.totalorder %s247, %s261
      %p263 = scmp.eq.s32.totalorder %s40, 0
      %p264 = por %p262, %p263
      %s266 = sadd.s32 %s265, 1
      %p269 = scmp.eq.s32.totalorder %s34, 1
      %p270 = scmp.ne.s32.totalorder %s265, %s267
      %p271 = scmp.eq.s32.totalorder %s34, 0
      %p272 = por %p270, %p271
      %p273 = scmp.ne.s32.totalorder %s265, %s267
      %p274 = scmp.eq.s32.totalorder %s39, 1
      %p275 = por %p273, %p274
      %p276 = scmp.ne.s32.totalorder %s267, %s268
      %p277 = scmp.eq.s32.totalorder %s39, 0
      %p278 = por %p276, %p277
      %p279 = scmp.ne.s32.totalorder %s267, %s268
      %p280 = scmp.eq.s32.totalorder %s40, 1
      %p281 = por %p279, %p280
      %p283 = scmp.ne.s32.totalorder %s268, %s282
      %p284 = scmp.eq.s32.totalorder %s40, 0
      %p285 = por %p283, %p284
      %s287 = sadd.s32 %s286, 1
      %p290 = scmp.eq.s32.totalorder %s34, 1
      %p291 = scmp.ne.s32.totalorder %s286, %s288
      %p292 = scmp.eq.s32.totalorder %s34, 0
      %p293 = por %p291, %p292
      %p294 = scmp.ne.s32.totalorder %s286, %s288
      %p295 = scmp.eq.s32.totalorder %s39, 1
      %p296 = por %p294, %p295
      %p297 = scmp.ne.s32.totalorder %s288, %s289
      %p298 = scmp.eq.s32.totalorder %s39, 0
      %p299 = por %p297, %p298
      %p300 = scmp.ne.s32.totalorder %s288, %s289
      %p301 = scmp.eq.s32.totalorder %s40, 1
      %p302 = por %p300, %p301
      %p304 = scmp.ne.s32.totalorder %s289, %s303
      %p305 = scmp.eq.s32.totalorder %s40, 0
      %p306 = por %p304, %p305
      %s308 = sadd.s32 %s307, 1
      %p311 = scmp.eq.s32.totalorder %s34, 1
      %p312 = scmp.ne.s32.totalorder %s307, %s309
      %p313 = scmp.eq.s32.totalorder %s34, 0
      %p314 = por %p312, %p313
      %p315 = scmp.ne.s32.totalorder %s307, %s309
      %p316 = scmp.eq.s32.totalorder %s39, 1
      %p317 = por %p315, %p316
      %p318 = scmp.ne.s32.totalorder %s309, %s310
      %p319 = scmp.eq.s32.totalorder %s39, 0
      %p320 = por %p318, %p319
      %p321 = scmp.ne.s32.totalorder %s309, %s310
      %p322 = scmp.eq.s32.totalorder %s40, 1
      %p323 = por %p321, %p322
      %p325 = scmp.ne.s32.totalorder %s310, %s324
      %p326 = scmp.eq.s32.totalorder %s40, 0
      %p327 = por %p325, %p326
      %s328 = ssub.s32 %s41, %s53
      %s329 = ssub.s32 %s42, %s49
      %s330 = sor.u32 %s328, %s329
      %p331 = scmp.eq.s32.totalorder %s330, 0
      %s333 = sadd.s32 %s332, 1
      %s334 = scalar_select %p331, %s332, %s333
      %p337 = pneg %p331
      %p338 = scmp.eq.s32.totalorder %s34, 1
      %p339 = por %p337, %p338
      %p340 = scmp.ne.s32.totalorder %s332, %s335
      %p341 = scmp.eq.s32.totalorder %s34, 0
      %p342 = por %p340, %p341
      %p343 = scmp.ne.s32.totalorder %s332, %s335
      %p344 = scmp.eq.s32.totalorder %s39, 1
      %p345 = por %p343, %p344
      %p346 = scmp.ne.s32.totalorder %s335, %s336
      %p347 = scmp.eq.s32.totalorder %s39, 0
      %p348 = por %p346, %p347
      %p349 = scmp.ne.s32.totalorder %s335, %s336
      %p350 = scmp.eq.s32.totalorder %s40, 1
      %p351 = por %p349, %p350
      %p353 = scmp.ne.s32.totalorder %s336, %s352
      %p354 = scmp.eq.s32.totalorder %s40, 0
      %p355 = por %p353, %p354
      %s356 = ssub.s32 %s41, %s53
      %s357 = ssub.s32 %s42, %s49
      %s358 = sor.u32 %s356, %s357
      %p359 = scmp.eq.s32.totalorder %s358, 0
      %s361 = sadd.s32 %s360, 1
      %s362 = scalar_select %p359, %s360, %s361
      %p365 = pneg %p359
      %p366 = scmp.eq.s32.totalorder %s34, 1
      %p367 = por %p365, %p366
      %p368 = scmp.ne.s32.totalorder %s360, %s363
      %p369 = scmp.eq.s32.totalorder %s34, 0
      %p370 = por %p368, %p369
      %p371 = scmp.ne.s32.totalorder %s360, %s363
      %p372 = scmp.eq.s32.totalorder %s39, 1
      %p373 = por %p371, %p372
      %p374 = scmp.ne.s32.totalorder %s363, %s364
      %p375 = scmp.eq.s32.totalorder %s39, 0
      %p376 = por %p374, %p375
      %p377 = scmp.ne.s32.totalorder %s363, %s364
      %p378 = scmp.eq.s32.totalorder %s40, 1
      %p379 = por %p377, %p378
      %p381 = scmp.ne.s32.totalorder %s364, %s380
      %p382 = scmp.eq.s32.totalorder %s40, 0
      %p383 = por %p381, %p382
      %p384 = scmp.le.s32.totalorder 1, %s34
      %p385 = scmp.lt.s32.totalorder %s34, 3
      %p386 = pnand %p384, %p385
      %p387 = pneg %p386
      // Predicated region
      $region9: #{tpu_custom_call.1} parent=5 // pred_check
        _
      $region10: #{tpu_custom_call.1} parent=5 // pred_check_branch
        %389 = sbr.rel (%p386) target = $region12
      $region11: #{tpu_custom_call.1} parent=5 // pred_region
        %s390 = ssub.s32 %s34, 1
        // Predicated region
        $region13: #{tpu_custom_call.1} parent=11 // pred_check
          %p391 = pneg %p152
        $region14: #{tpu_custom_call.1} parent=11 // pred_check_branch
          %393 = sbr.rel (%p391) target = $region16
        $region15: #{tpu_custom_call.1} parent=11 // pred_region
          %s395 = ssub.s32 128, 128
          %396 = vsyncadd [#allocation10], %s395
          %s397 = smul.addr %s44, 128
          %s398 = scalar_lea.hbm %s3, %s397
          %s400 = sshll.u32 [#allocation9], 4
          %s401 = int_to_ptr.vmem [resolvable:$true] %s400
          %403 = dma.hbm_to_vmem [thread:$0]  %s398, 128, %s401, [#allocation10]
        $region16: #{tpu_custom_call.1} parent=11 // pred_fallthru
          _
        // Predicated region
        $region17: #{tpu_custom_call.1} parent=11 // pred_check
          %p404 = pneg %p173
        $region18: #{tpu_custom_call.1} parent=11 // pred_check_branch
          %406 = sbr.rel (%p404) target = $region20
        $region19: #{tpu_custom_call.1} parent=11 // pred_region
          %s408 = ssub.s32 256, 256
          %409 = vsyncadd [#allocation10], %s408
          %s410 = sshll.u32 [#allocation11], 4
          %s411 = int_to_ptr.vmem [resolvable:$true] %s410
          %416 = dma.hbm_to_vmem [thread:$0]  %s4, 256, %s411, [#allocation10], 64, 64, 4
        $region20: #{tpu_custom_call.1} parent=11 // pred_fallthru
          _
        // Predicated region
        $region21: #{tpu_custom_call.1} parent=11 // pred_check
          %p417 = pneg %p194
        $region22: #{tpu_custom_call.1} parent=11 // pred_check_branch
          %419 = sbr.rel (%p417) target = $region24
        $region23: #{tpu_custom_call.1} parent=11 // pred_region
          _
        $region24: #{tpu_custom_call.1} parent=11 // pred_fallthru
          _
        // Predicated region
        $region25: #{tpu_custom_call.1} parent=11 // pred_check
          %p420 = pneg %p215
        $region26: #{tpu_custom_call.1} parent=11 // pred_check_branch
          %422 = sbr.rel (%p420) target = $region28
        $region27: #{tpu_custom_call.1} parent=11 // pred_region
          _
        $region28: #{tpu_custom_call.1} parent=11 // pred_fallthru
          _
        // Predicated region
        $region29: #{tpu_custom_call.1} parent=11 // pred_check
          %p423 = pneg %p236
        $region30: #{tpu_custom_call.1} parent=11 // pred_check_branch
          %425 = sbr.rel (%p423) target = $region32
        $region31: #{tpu_custom_call.1} parent=11 // pred_region
          _
        $region32: #{tpu_custom_call.1} parent=11 // pred_fallthru
          _
        // Predicated region
        $region33: #{tpu_custom_call.1} parent=11 // pred_check
          %p426 = pneg %p257
        $region34: #{tpu_custom_call.1} parent=11 // pred_check_branch
          %428 = sbr.rel (%p426) target = $region36
        $region35: #{tpu_custom_call.1} parent=11 // pred_region
          %s430 = ssub.s32 256, 256
          %431 = vsyncadd [#allocation13], %s430
          %s432 = sshll.u32 [#allocation12], 4
          %s433 = int_to_ptr.vmem [resolvable:$true] %s432
          %438 = dma.hbm_to_vmem [thread:$0]  %s8, 256, %s433, [#allocation13], 64, 64, 4
        $region36: #{tpu_custom_call.1} parent=11 // pred_fallthru
          _
        // Predicated region
        $region37: #{tpu_custom_call.1} parent=11 // pred_check
          %p439 = pneg %p278
        $region38: #{tpu_custom_call.1} parent=11 // pred_check_branch
          %441 = sbr.rel (%p439) target = $region40
        $region39: #{tpu_custom_call.1} parent=11 // pred_region
          %s443 = ssub.s32 16, 16
          %444 = vsyncadd [#allocation13], %s443
          %s446 = sshll.u32 [#allocation14], 4
          %s447 = int_to_ptr.vmem [resolvable:$true] %s446
          %449 = dma.hbm_to_vmem [thread:$0]  %s9, 16, %s447, [#allocation13]
        $region40: #{tpu_custom_call.1} parent=11 // pred_fallthru
          _
        // Predicated region
        $region41: #{tpu_custom_call.1} parent=11 // pred_check
          %p450 = pneg %p299
        $region42: #{tpu_custom_call.1} parent=11 // pred_check_branch
          %452 = sbr.rel (%p450) target = $region44
        $region43: #{tpu_custom_call.1} parent=11 // pred_region
          _
        $region44: #{tpu_custom_call.1} parent=11 // pred_fallthru
          _
        // Predicated region
        $region45: #{tpu_custom_call.1} parent=11 // pred_check
          %p453 = pneg %p320
        $region46: #{tpu_custom_call.1} parent=11 // pred_check_branch
          %455 = sbr.rel (%p453) target = $region48
        $region47: #{tpu_custom_call.1} parent=11 // pred_region
          _
        $region48: #{tpu_custom_call.1} parent=11 // pred_fallthru
          _
      $region12: #{tpu_custom_call.1} parent=5 // pred_fallthru
        _
      %p456 = scmp.lt.s32.totalorder %s34, 2
      // Predicated region
      $region49: #{tpu_custom_call.1} parent=5 // pred_check
        %p457 = pneg %p456
      $region50: #{tpu_custom_call.1} parent=5 // pred_check_branch
        %459 = sbr.rel (%p457) target = $region52
      $region51: #{tpu_custom_call.1} parent=5 // pred_region
        // Predicated region
        $region53: #{tpu_custom_call.1} parent=51 // pred_check
          %p460 = pneg %p68
        $region54: #{tpu_custom_call.1} parent=51 // pred_check_branch
          %462 = sbr.rel (%p460) target = $region56
        $region55: #{tpu_custom_call.1} parent=51 // pred_region
          %s463 = sand.u32 %s58, 1
          %s464 = scalar_lea.sflag [#allocation4], %s463
          %s465 = sand.u32 %s58, 1
          %s466 = smul.addr %s465, 4
          %s467 = scalar_lea.vmem [#allocation3], %s466
          %s469 = ssub.s32 64, 64
          %470 = vsyncadd %s464, %s469
          %s471 = sadd.s32 %s42, %s41
          %s472 = smul.addr %s471, 64
          %s473 = scalar_lea.hbm %s0, %s472
          %s475 = sshll.u32 %s467, 4
          %s476 = int_to_ptr.vmem [resolvable:$true] %s475
          %478 = dma.hbm_to_vmem [thread:$0]  %s473, 64, %s476, %s464
        $region56: #{tpu_custom_call.1} parent=51 // pred_fallthru
          _
        // Predicated region
        $region57: #{tpu_custom_call.1} parent=51 // pred_check
          %p479 = pneg %p94
        $region58: #{tpu_custom_call.1} parent=51 // pred_check_branch
          %481 = sbr.rel (%p479) target = $region60
        $region59: #{tpu_custom_call.1} parent=51 // pred_region
          %s482 = sand.u32 %s34, 1
          %s483 = scalar_lea.sflag [#allocation7], %s482
          %s484 = sand.u32 %s84, 1
          %s485 = smul.addr %s484, 4
          %s486 = scalar_lea.vmem [#allocation6], %s485
          %s488 = ssub.s32 64, 64
          %489 = vsyncadd %s483, %s488
          %s490 = smul.addr %s41, 64
          %s491 = scalar_lea.hbm %s1, %s490
          %s493 = sshll.u32 %s486, 4
          %s494 = int_to_ptr.vmem [resolvable:$true] %s493
          %496 = dma.hbm_to_vmem [thread:$0]  %s491, 64, %s494, %s483
        $region60: #{tpu_custom_call.1} parent=51 // pred_fallthru
          _
        // Predicated region
        $region61: #{tpu_custom_call.1} parent=51 // pred_check
          %p497 = pneg %p120
        $region62: #{tpu_custom_call.1} parent=51 // pred_check_branch
          %499 = sbr.rel (%p497) target = $region64
        $region63: #{tpu_custom_call.1} parent=51 // pred_region
          %s500 = sand.u32 %s34, 1
          %s501 = scalar_lea.sflag [#allocation7], %s500
          %s502 = sand.u32 %s110, 1
          %s503 = smul.addr %s502, 4
          %s504 = scalar_lea.vmem [#allocation8], %s503
          %s506 = ssub.s32 64, 64
          %507 = vsyncadd %s501, %s506
          %s508 = smul.addr %s41, 64
          %s509 = scalar_lea.hbm %s2, %s508
          %s511 = sshll.u32 %s504, 4
          %s512 = int_to_ptr.vmem [resolvable:$true] %s511
          %514 = dma.hbm_to_vmem [thread:$0]  %s509, 64, %s512, %s501
        $region64: #{tpu_custom_call.1} parent=51 // pred_fallthru
          _
      $region52: #{tpu_custom_call.1} parent=5 // pred_fallthru
        _
      %p515 = scmp.le.s32.totalorder 1, %s34
      %p516 = scmp.lt.s32.totalorder %s34, 3
      %p517 = pnand %p515, %p516
      %p518 = pneg %p517
      // Predicated region
      $region65: #{tpu_custom_call.1} parent=5 // pred_check
        _
      $region66: #{tpu_custom_call.1} parent=5 // pred_check_branch
        %520 = sbr.rel (%p517) target = $region68
      $region67: #{tpu_custom_call.1} parent=5 // pred_region
        %s521 = ssub.s32 %s34, 1
        %s522 = sand.u32 %s61, 1
        %s523 = scalar_lea.sflag [#allocation4], %s522
        %s524 = sand.u32 %s61, 1
        %s525 = smul.addr %s524, 4
        %s526 = scalar_lea.vmem [#allocation3], %s525
        // Predicated region
        $region69: #{tpu_custom_call.1} parent=67 // pred_check
          %p527 = pneg %p74
        $region70: #{tpu_custom_call.1} parent=67 // pred_check_branch
          %529 = sbr.rel (%p527) target = $region72
        $region71: #{tpu_custom_call.1} parent=67 // pred_region
          %530 = dma.done %s523, 64
        $region72: #{tpu_custom_call.1} parent=67 // pred_fallthru
          _
        %s531 = sand.u32 %s39, 1
        %s532 = scalar_lea.sflag [#allocation7], %s531
        %s533 = sand.u32 %s87, 1
        %s534 = smul.addr %s533, 4
        %s535 = scalar_lea.vmem [#allocation6], %s534
        // Predicated region
        $region73: #{tpu_custom_call.1} parent=67 // pred_check
          %p536 = pneg %p100
        $region74: #{tpu_custom_call.1} parent=67 // pred_check_branch
          %538 = sbr.rel (%p536) target = $region76
        $region75: #{tpu_custom_call.1} parent=67 // pred_region
          %539 = dma.done %s532, 64
        $region76: #{tpu_custom_call.1} parent=67 // pred_fallthru
          _
        %s540 = sand.u32 %s39, 1
        %s541 = scalar_lea.sflag [#allocation7], %s540
        %s542 = sand.u32 %s113, 1
        %s543 = smul.addr %s542, 4
        %s544 = scalar_lea.vmem [#allocation8], %s543
        // Predicated region
        $region77: #{tpu_custom_call.1} parent=67 // pred_check
          %p545 = pneg %p126
        $region78: #{tpu_custom_call.1} parent=67 // pred_check_branch
          %547 = sbr.rel (%p545) target = $region80
        $region79: #{tpu_custom_call.1} parent=67 // pred_region
          %548 = dma.done %s541, 64
        $region80: #{tpu_custom_call.1} parent=67 // pred_fallthru
          _
        // Predicated region
        $region81: #{tpu_custom_call.1} parent=67 // pred_check
          %p549 = pneg %p152
        $region82: #{tpu_custom_call.1} parent=67 // pred_check_branch
          %551 = sbr.rel (%p549) target = $region84
        $region83: #{tpu_custom_call.1} parent=67 // pred_region
          %552 = dma.done [#allocation10], 128
        $region84: #{tpu_custom_call.1} parent=67 // pred_fallthru
          _
        // Predicated region
        $region85: #{tpu_custom_call.1} parent=67 // pred_check
          %p553 = pneg %p173
        $region86: #{tpu_custom_call.1} parent=67 // pred_check_branch
          %555 = sbr.rel (%p553) target = $region88
        $region87: #{tpu_custom_call.1} parent=67 // pred_region
          %556 = dma.done [#allocation10], 256
        $region88: #{tpu_custom_call.1} parent=67 // pred_fallthru
          _
        // Predicated region
        $region89: #{tpu_custom_call.1} parent=67 // pred_check
          %p557 = pneg %p257
        $region90: #{tpu_custom_call.1} parent=67 // pred_check_branch
          %559 = sbr.rel (%p557) target = $region92
        $region91: #{tpu_custom_call.1} parent=67 // pred_region
          %560 = dma.done [#allocation13], 256
        $region92: #{tpu_custom_call.1} parent=67 // pred_fallthru
          _
        // Predicated region
        $region93: #{tpu_custom_call.1} parent=67 // pred_check
          %p561 = pneg %p278
        $region94: #{tpu_custom_call.1} parent=67 // pred_check_branch
          %563 = sbr.rel (%p561) target = $region96
        $region95: #{tpu_custom_call.1} parent=67 // pred_region
          %564 = dma.done [#allocation13], 16
        $region96: #{tpu_custom_call.1} parent=67 // pred_fallthru
          _
        %s565 = sand.u32 %s61, 1
        %s566 = scalar_lea.sflag [#allocation4], %s565
        %s567 = sand.u32 %s61, 1
        %s568 = smul.addr %s567, 4
        %s569 = scalar_lea.vmem [#allocation3], %s568
        %p570 = pneg %p74
        %p571 = pneg %p71
        %s572 = sand.u32 %s39, 1
        %s573 = scalar_lea.sflag [#allocation7], %s572
        %s574 = sand.u32 %s87, 1
        %s575 = smul.addr %s574, 4
        %s576 = scalar_lea.vmem [#allocation6], %s575
        %p577 = pneg %p100
        %p578 = pneg %p97
        %s579 = sand.u32 %s39, 1
        %s580 = scalar_lea.sflag [#allocation7], %s579
        %s581 = sand.u32 %s113, 1
        %s582 = smul.addr %s581, 4
        %s583 = scalar_lea.vmem [#allocation8], %s582
        %p584 = pneg %p126
        %p585 = pneg %p123
        %p586 = pneg %p152
        %p587 = pneg %p149
        %p588 = pneg %p173
        %p589 = pneg %p170
        %p590 = pneg %p194
        %p591 = pneg %p191
        %p592 = pneg %p215
        %p593 = pneg %p212
        %p594 = pneg %p236
        %p595 = pneg %p233
        %p596 = pneg %p257
        %p597 = pneg %p254
        %p598 = pneg %p278
        %p599 = pneg %p275
        %p600 = pneg %p299
        %p601 = pneg %p296
        %p602 = pneg %p320
        %p603 = pneg %p317
        %p604 = pneg %p348
        %p605 = pneg %p345
        %s606 = sand.u32 %s335, 1
        %s607 = scalar_lea.sflag [#allocation5], %s606
        %s608 = sand.u32 %s335, 1
        %s609 = smul.addr %s608, 4
        %s610 = scalar_lea.vmem [#allocation15], %s609
        %p611 = pneg %p376
        %p612 = pneg %p373
        %s613 = sand.u32 %s363, 1
        %s614 = scalar_lea.sflag [#allocation17], %s613
        %s615 = sand.u32 %s363, 1
        %s616 = smul.addr %s615, 16
        %s617 = scalar_lea.vmem [#allocation16], %s616
        %v619 = vld [vmem:[%s526] sm:$0xf]
        %v620 = vld [vmem:[#allocation11] sm:$0xf]
        %v621 = vld [vmem:[#allocation11 + $0x4] sm:$0xf]
        %v622 = vld [vmem:[#allocation11 + $0x8] sm:$0xf]
        %v623 = vld [vmem:[#allocation11 + $0xc] sm:$0xf]
        %v624 = vld [vmem:[%s5] sm:$0x1]
        %v626 = vlaneseq
        %v627 = vshrl.u32 %v626, 7
        %v628 = vsub.s32 0, %v627
        %v629 = vrot.slane %v624, %v628
        %v635 = vunpack.c.l.b16 %v620
        %v636 = vunpack.c.l.b16 %v621
        %v637 = vunpack.c.l.b16 %v622
        %v638 = vunpack.c.l.b16 %v623
        %v639 = vpack.c.b16 %v636, %v635
        %v640 = vpack.c.b16 %v638, %v637
        %vm643 = vcmask 261120
        %v645 = vsel %vm643, %v619, 0
        %647 = vmatprep.subr.bf16.mxu0 0
        %648 = vmatpush1.bf16.msra.mxu0 %v639
        %649 = vmatprep.subr.bf16.mxu0 0
        %650 = vmatpush1.bf16.msra.mxu0 %v640
        %651 = vmatprep.subr.bf16.mxu0 0
        %652 = vmatpush1.bf16.msra.mxu0 0
        %653 = vmatprep.subr.bf16.mxu0 0
        %654 = vmatpush1.bf16.msra.mxu0 0
        %655 = vmatprep.subr.bf16.mxu0 0
        %656 = vmatpush1.bf16.msra.mxu0 0
        %657 = vmatprep.subr.bf16.mxu0 0
        %658 = vmatpush1.bf16.msra.mxu0 0
        %659 = vmatprep.subr.bf16.mxu0 0
        %660 = vmatpush1.bf16.msra.mxu0 0
        %661 = vmatprep.subr.bf16.mxu0 0
        %662 = vmatpush1.bf16.msra.mxu0 0
        %663 = vmatprep.subr.bf16.mxu0 0
        %664 = vmatpush1.bf16.msra.mxu0 0
        %665 = vmatprep.subr.bf16.mxu0 0
        %666 = vmatpush1.bf16.msra.mxu0 0
        %667 = vmatprep.subr.bf16.mxu0 0
        %668 = vmatpush1.bf16.msra.mxu0 0
        %669 = vmatprep.subr.bf16.mxu0 0
        %670 = vmatpush1.bf16.msra.mxu0 0
        %671 = vmatprep.subr.bf16.mxu0 0
        %672 = vmatpush1.bf16.msra.mxu0 0
        %673 = vmatprep.subr.bf16.mxu0 0
        %674 = vmatpush1.bf16.msra.mxu0 0
        %675 = vmatprep.subr.bf16.mxu0 0
        %676 = vmatpush1.bf16.msra.mxu0 0
        %677 = vmatprep.subr.bf16.mxu0 0
        %678 = vmatpush1.bf16.msra.mxu0 0
        %679 = vmatprep.mubr.bf16.mxu0 0
        %680 = vmatmul.mubr.bf16.gmra.mrb[0].mxu0 %v645
        %v681 = vpop.f32.mrb[0].mxu0
        %v682 = vadd.f32 %v629, %v681
        %v683 = vpop.f32.mrb[0].mxu0
        %v684 = vpop.f32.mrb[0].mxu0
        %v685 = vpop.f32.mrb[0].mxu0
        %686 = vdwg.mxu0
        %v687 = vld [vmem:[%s535] sm:$0xf]
        %v688 = vld [vmem:[%s6] sm:$0xf]
        %v689 = vld [vmem:[%s6 + $0x4] sm:$0xf]
        %v690 = vld [vmem:[%s6 + $0x8] sm:$0xf]
        %v691 = vld [vmem:[%s6 + $0xc] sm:$0xf]
        %v692 = vld [vmem:[%s7] sm:$0x1]
        %v694 = vlaneseq
        %v695 = vshrl.u32 %v694, 7
        %v696 = vsub.s32 0, %v695
        %v697 = vrot.slane %v692, %v696
        %v703 = vunpack.c.l.b16 %v688
        %v704 = vunpack.c.l.b16 %v689
        %v705 = vunpack.c.l.b16 %v690
        %v706 = vunpack.c.l.b16 %v691
        %v707 = vpack.c.b16 %v704, %v703
        %v708 = vpack.c.b16 %v706, %v705
        %v712 = vsel %vm643, %v687, 0
        %714 = vmatprep.subr.bf16.mxu0 0
        %715 = vmatpush1.bf16.msra.mxu0 %v707
        %716 = vmatprep.subr.bf16.mxu0 0
        %717 = vmatpush1.bf16.msra.mxu0 %v708
        %718 = vmatprep.subr.bf16.mxu0 0
        %719 = vmatpush1.bf16.msra.mxu0 0
        %720 = vmatprep.subr.bf16.mxu0 0
        %721 = vmatpush1.bf16.msra.mxu0 0
        %722 = vmatprep.subr.bf16.mxu0 0
        %723 = vmatpush1.bf16.msra.mxu0 0
        %724 = vmatprep.subr.bf16.mxu0 0
        %725 = vmatpush1.bf16.msra.mxu0 0
        %726 = vmatprep.subr.bf16.mxu0 0
        %727 = vmatpush1.bf16.msra.mxu0 0
        %728 = vmatprep.subr.bf16.mxu0 0
        %729 = vmatpush1.bf16.msra.mxu0 0
        %730 = vmatprep.subr.bf16.mxu0 0
        %731 = vmatpush1.bf16.msra.mxu0 0
        %732 = vmatprep.subr.bf16.mxu0 0
        %733 = vmatpush1.bf16.msra.mxu0 0
        %734 = vmatprep.subr.bf16.mxu0 0
        %735 = vmatpush1.bf16.msra.mxu0 0
        %736 = vmatprep.subr.bf16.mxu0 0
        %737 = vmatpush1.bf16.msra.mxu0 0
        %738 = vmatprep.subr.bf16.mxu0 0
        %739 = vmatpush1.bf16.msra.mxu0 0
        %740 = vmatprep.subr.bf16.mxu0 0
        %741 = vmatpush1.bf16.msra.mxu0 0
        %742 = vmatprep.subr.bf16.mxu0 0
        %743 = vmatpush1.bf16.msra.mxu0 0
        %744 = vmatprep.subr.bf16.mxu0 0
        %745 = vmatpush1.bf16.msra.mxu0 0
        %746 = vmatprep.mubr.bf16.mxu0 0
        %747 = vmatmul.mubr.bf16.gmra.mrb[0].mxu0 %v712
        %v748 = vpop.f32.mrb[0].mxu0
        %v749 = vadd.f32 %v697, %v748
        %v750 = vpop.f32.mrb[0].mxu0
        %v751 = vpop.f32.mrb[0].mxu0
        %v752 = vpop.f32.mrb[0].mxu0
        %753 = vdwg.mxu0
        %v754 = vld [vmem:[%s544] sm:$0xf]
        %v755 = vld [vmem:[#allocation12] sm:$0xf]
        %v756 = vld [vmem:[#allocation12 + $0x4] sm:$0xf]
        %v757 = vld [vmem:[#allocation12 + $0x8] sm:$0xf]
        %v758 = vld [vmem:[#allocation12 + $0xc] sm:$0xf]
        %v759 = vld [vmem:[#allocation14] sm:$0x1]
        %v761 = vlaneseq
        %v762 = vshrl.u32 %v761, 7
        %v763 = vsub.s32 0, %v762
        %v764 = vrot.slane %v759, %v763
        %v770 = vunpack.c.l.b16 %v755
        %v771 = vunpack.c.l.b16 %v756
        %v772 = vunpack.c.l.b16 %v757
        %v773 = vunpack.c.l.b16 %v758
        %v774 = vpack.c.b16 %v771, %v770
        %v775 = vpack.c.b16 %v773, %v772
        %v779 = vsel %vm643, %v754, 0
        %781 = vmatprep.subr.bf16.mxu0 0
        %782 = vmatpush1.bf16.msra.mxu0 %v774
        %783 = vmatprep.subr.bf16.mxu0 0
        %784 = vmatpush1.bf16.msra.mxu0 %v775
        %785 = vmatprep.subr.bf16.mxu0 0
        %786 = vmatpush1.bf16.msra.mxu0 0
        %787 = vmatprep.subr.bf16.mxu0 0
        %788 = vmatpush1.bf16.msra.mxu0 0
        %789 = vmatprep.subr.bf16.mxu0 0
        %790 = vmatpush1.bf16.msra.mxu0 0
        %791 = vmatprep.subr.bf16.mxu0 0
        %792 = vmatpush1.bf16.msra.mxu0 0
        %793 = vmatprep.subr.bf16.mxu0 0
        %794 = vmatpush1.bf16.msra.mxu0 0
        %795 = vmatprep.subr.bf16.mxu0 0
        %796 = vmatpush1.bf16.msra.mxu0 0
        %797 = vmatprep.subr.bf16.mxu0 0
        %798 = vmatpush1.bf16.msra.mxu0 0
        %799 = vmatprep.subr.bf16.mxu0 0
        %800 = vmatpush1.bf16.msra.mxu0 0
        %801 = vmatprep.subr.bf16.mxu0 0
        %802 = vmatpush1.bf16.msra.mxu0 0
        %803 = vmatprep.subr.bf16.mxu0 0
        %804 = vmatpush1.bf16.msra.mxu0 0
        %805 = vmatprep.subr.bf16.mxu0 0
        %806 = vmatpush1.bf16.msra.mxu0 0
        %807 = vmatprep.subr.bf16.mxu0 0
        %808 = vmatpush1.bf16.msra.mxu0 0
        %809 = vmatprep.subr.bf16.mxu0 0
        %810 = vmatpush1.bf16.msra.mxu0 0
        %811 = vmatprep.subr.bf16.mxu0 0
        %812 = vmatpush1.bf16.msra.mxu0 0
        %813 = vmatprep.mubr.bf16.mxu0 0
        %814 = vmatmul.mubr.bf16.gmra.mrb[0].mxu0 %v779
        %v815 = vpop.f32.mrb[0].mxu0
        %v816 = vadd.f32 %v764, %v815
        %v817 = vpop.f32.mrb[0].mxu0
        %v818 = vpop.f32.mrb[0].mxu0
        %v819 = vpop.f32.mrb[0].mxu0
        %820 = vdwg.mxu0
        %v821 = vld [vmem:[#allocation9] sm:$0xff]
        %vm822 = vcmp.eq.s32.totalorder %v821, 0
        %v823 = vpack.c.bf16 %v682, %v682
        %v824 = vpack.c.bf16 %v749, %v749
        %v825 = vpack.c.bf16 %v816, %v816
        %vm826 = vcmask 64512
        %v828 = vsel %vm826, %v823, 0
        %v831 = vsel %vm826, %v824, 0
        %833 = vmatprep.subr.bf16.mxu0 0
        %834 = vmatpush1.bf16.xpose.msra.mxu0 %v831
        %835 = vmatprep.subr.bf16.mxu0 0
        %836 = vmatpush1.bf16.xpose.msra.mxu0 0
        %837 = vmatprep.subr.bf16.mxu0 0
        %838 = vmatpush1.bf16.xpose.msra.mxu0 0
        %839 = vmatprep.subr.bf16.mxu0 0
        %840 = vmatpush1.bf16.xpose.msra.mxu0 0
        %841 = vmatprep.subr.bf16.mxu0 0
        %842 = vmatpush1.bf16.xpose.msra.mxu0 0
        %843 = vmatprep.subr.bf16.mxu0 0
        %844 = vmatpush1.bf16.xpose.msra.mxu0 0
        %845 = vmatprep.subr.bf16.mxu0 0
        %846 = vmatpush1.bf16.xpose.msra.mxu0 0
        %847 = vmatprep.subr.bf16.mxu0 0
        %848 = vmatpush1.bf16.xpose.msra.mxu0 0
        %849 = vmatprep.subr.bf16.mxu0 0
        %850 = vmatpush1.bf16.xpose.msra.mxu0 0
        %851 = vmatprep.subr.bf16.mxu0 0
        %852 = vmatpush1.bf16.xpose.msra.mxu0 0
        %853 = vmatprep.subr.bf16.mxu0 0
        %854 = vmatpush1.bf16.xpose.msra.mxu0 0
        %855 = vmatprep.subr.bf16.mxu0 0
        %856 = vmatpush1.bf16.xpose.msra.mxu0 0
        %857 = vmatprep.subr.bf16.mxu0 0
        %858 = vmatpush1.bf16.xpose.msra.mxu0 0
        %859 = vmatprep.subr.bf16.mxu0 0
        %860 = vmatpush1.bf16.xpose.msra.mxu0 0
        %861 = vmatprep.subr.bf16.mxu0 0
        %862 = vmatpush1.bf16.xpose.msra.mxu0 0
        %863 = vmatprep.subr.bf16.mxu0 0
        %864 = vmatpush1.bf16.xpose.msra.mxu0 0
        %865 = vmatprep.mubr.bf16.mxu0 0
        %866 = vmatmul.mubr.bf16.gmra.mrb[0].mxu0 %v828
        %v867 = vpop.f32.mrb[0].mxu0
        %v868 = vadd.f32 0.0, %v867
        %v869 = vpop.f32.mrb[0].mxu0
        %v870 = vpop.f32.mrb[0].mxu0
        %v871 = vpop.f32.mrb[0].mxu0
        %872 = vdwg.mxu0
        %v873 = vmul.f32 %v868, 0.35355338
        %v874 = vsel %vm822, -inf, %v873
        %v875 = vsel %vm826, %v874, -inf
        %876 = vmax.xlane.f32.xlu0 %v875
        %v877 = vpop.xlane.xlu0 %876
        %v878 = vsub.f32 %v874, %v877
        %v879 = vmul.f32 %v878, 1.442695
        %v880 = vpow.pop %v879
        %v881 = vsel %vm826, %v880, 0.0
        %882 = vadd.xlane.f32.xlu0 %v881
        %v883 = vpop.xlane.xlu0 %882
        %v884 = vrcp.pop %v883
        %v885 = vmul.f32 %v880, %v884
        %v886 = vpack.c.bf16 %v885, %v885
        %vm887 = vcmask 60416
        %888 = vst.msk [vmem:[%s617] sm:$0xf] %vm887, %v886
        %v890 = vsel %vm826, %v886, 0
        %vm892 = vcmask 1043456
        %v894 = vsel %vm892, %v825, 0
        %896 = vmatprep.subr.bf16.mxu0 0
        %897 = vmatpush1.bf16.msra.mxu0 %v894
        %898 = vmatprep.subr.bf16.mxu0 0
        %899 = vmatpush1.bf16.msra.mxu0 0
        %900 = vmatprep.subr.bf16.mxu0 0
        %901 = vmatpush1.bf16.msra.mxu0 0
        %902 = vmatprep.subr.bf16.mxu0 0
        %903 = vmatpush1.bf16.msra.mxu0 0
        %904 = vmatprep.subr.bf16.mxu0 0
        %905 = vmatpush1.bf16.msra.mxu0 0
        %906 = vmatprep.subr.bf16.mxu0 0
        %907 = vmatpush1.bf16.msra.mxu0 0
        %908 = vmatprep.subr.bf16.mxu0 0
        %909 = vmatpush1.bf16.msra.mxu0 0
        %910 = vmatprep.subr.bf16.mxu0 0
        %911 = vmatpush1.bf16.msra.mxu0 0
        %912 = vmatprep.subr.bf16.mxu0 0
        %913 = vmatpush1.bf16.msra.mxu0 0
        %914 = vmatprep.subr.bf16.mxu0 0
        %915 = vmatpush1.bf16.msra.mxu0 0
        %916 = vmatprep.subr.bf16.mxu0 0
        %917 = vmatpush1.bf16.msra.mxu0 0
        %918 = vmatprep.subr.bf16.mxu0 0
        %919 = vmatpush1.bf16.msra.mxu0 0
        %920 = vmatprep.subr.bf16.mxu0 0
        %921 = vmatpush1.bf16.msra.mxu0 0
        %922 = vmatprep.subr.bf16.mxu0 0
        %923 = vmatpush1.bf16.msra.mxu0 0
        %924 = vmatprep.subr.bf16.mxu0 0
        %925 = vmatpush1.bf16.msra.mxu0 0
        %926 = vmatprep.subr.bf16.mxu0 0
        %927 = vmatpush1.bf16.msra.mxu0 0
        %928 = vmatprep.mubr.bf16.mxu0 0
        %929 = vmatmul.mubr.bf16.gmra.mrb[0].mxu0 %v890
        %v930 = vpop.f32.mrb[0].mxu0
        %v931 = vadd.f32 0.0, %v930
        %v932 = vpop.f32.mrb[0].mxu0
        %v933 = vpop.f32.mrb[0].mxu0
        %v934 = vpop.f32.mrb[0].mxu0
        %935 = vdwg.mxu0
        %v936 = vpack.c.bf16 %v931, %v931
        %937 = vst.msk [vmem:[#allocation2] sm:$0xf] %vm887, %v936
        %939 = vrot.lane.b32.xlu0 %v823, 120
        %v940 = vpop.permute.xlu0 %939
        %942 = vrot.lane.b32.xlu0 %v824, 120
        %v943 = vpop.permute.xlu0 %942
        %v945 = vsel %vm826, %v940, 0
        %v948 = vsel %vm826, %v943, 0
        %950 = vmatprep.subr.bf16.mxu0 0
        %951 = vmatpush1.bf16.xpose.msra.mxu0 %v948
        %952 = vmatprep.subr.bf16.mxu0 0
        %953 = vmatpush1.bf16.xpose.msra.mxu0 0
        %954 = vmatprep.subr.bf16.mxu0 0
        %955 = vmatpush1.bf16.xpose.msra.mxu0 0
        %956 = vmatprep.subr.bf16.mxu0 0
        %957 = vmatpush1.bf16.xpose.msra.mxu0 0
        %958 = vmatprep.subr.bf16.mxu0 0
        %959 = vmatpush1.bf16.xpose.msra.mxu0 0
        %960 = vmatprep.subr.bf16.mxu0 0
        %961 = vmatpush1.bf16.xpose.msra.mxu0 0
        %962 = vmatprep.subr.bf16.mxu0 0
        %963 = vmatpush1.bf16.xpose.msra.mxu0 0
        %964 = vmatprep.subr.bf16.mxu0 0
        %965 = vmatpush1.bf16.xpose.msra.mxu0 0
        %966 = vmatprep.subr.bf16.mxu0 0
        %967 = vmatpush1.bf16.xpose.msra.mxu0 0
        %968 = vmatprep.subr.bf16.mxu0 0
        %969 = vmatpush1.bf16.xpose.msra.mxu0 0
        %970 = vmatprep.subr.bf16.mxu0 0
        %971 = vmatpush1.bf16.xpose.msra.mxu0 0
        %972 = vmatprep.subr.bf16.mxu0 0
        %973 = vmatpush1.bf16.xpose.msra.mxu0 0
        %974 = vmatprep.subr.bf16.mxu0 0
        %975 = vmatpush1.bf16.xpose.msra.mxu0 0
        %976 = vmatprep.subr.bf16.mxu0 0
        %977 = vmatpush1.bf16.xpose.msra.mxu0 0
        %978 = vmatprep.subr.bf16.mxu0 0
        %979 = vmatpush1.bf16.xpose.msra.mxu0 0
        %980 = vmatprep.subr.bf16.mxu0 0
        %981 = vmatpush1.bf16.xpose.msra.mxu0 0
        %982 = vmatprep.mubr.bf16.mxu0 0
        %983 = vmatmul.mubr.bf16.gmra.mrb[0].mxu0 %v945
        %v984 = vpop.f32.mrb[0].mxu0
        %v985 = vadd.f32 0.0, %v984
        %v986 = vpop.f32.mrb[0].mxu0
        %v987 = vpop.f32.mrb[0].mxu0
        %v988 = vpop.f32.mrb[0].mxu0
        %989 = vdwg.mxu0
        %v990 = vmul.f32 %v985, 0.35355338
        %v991 = vsel %vm822, -inf, %v990
        %v992 = vsel %vm826, %v991, -inf
        %993 = vmax.xlane.f32.xlu0 %v992
        %v994 = vpop.xlane.xlu0 %993
        %v995 = vsub.f32 %v991, %v994
        %v996 = vmul.f32 %v995, 1.442695
        %v997 = vpow.pop %v996
        %v998 = vsel %vm826, %v997, 0.0
        %999 = vadd.xlane.f32.xlu0 %v998
        %v1000 = vpop.xlane.xlu0 %999
        %v1001 = vrcp.pop %v1000
        %v1002 = vmul.f32 %v997, %v1001
        %v1003 = vpack.c.bf16 %v1002, %v1002
        %s1004 = scalar_lea.vmem %s617, 4 [#allocation16]
        %1005 = vst.msk [vmem:[%s1004] sm:$0xf] %vm887, %v1003
        %1007 = vrot.lane.b32.xlu0 %v825, 120
        %v1008 = vpop.permute.xlu0 %1007
        %v1010 = vsel %vm826, %v1003, 0
        %v1013 = vsel %vm892, %v1008, 0
        %1015 = vmatprep.subr.bf16.mxu0 0
        %1016 = vmatpush1.bf16.msra.mxu0 %v1013
        %1017 = vmatprep.subr.bf16.mxu0 0
        %1018 = vmatpush1.bf16.msra.mxu0 0
        %1019 = vmatprep.subr.bf16.mxu0 0
        %1020 = vmatpush1.bf16.msra.mxu0 0
        %1021 = vmatprep.subr.bf16.mxu0 0
        %1022 = vmatpush1.bf16.msra.mxu0 0
        %1023 = vmatprep.subr.bf16.mxu0 0
        %1024 = vmatpush1.bf16.msra.mxu0 0
        %1025 = vmatprep.subr.bf16.mxu0 0
        %1026 = vmatpush1.bf16.msra.mxu0 0
        %1027 = vmatprep.subr.bf16.mxu0 0
        %1028 = vmatpush1.bf16.msra.mxu0 0
        %1029 = vmatprep.subr.bf16.mxu0 0
        %1030 = vmatpush1.bf16.msra.mxu0 0
        %1031 = vmatprep.subr.bf16.mxu0 0
        %1032 = vmatpush1.bf16.msra.mxu0 0
        %1033 = vmatprep.subr.bf16.mxu0 0
        %1034 = vmatpush1.bf16.msra.mxu0 0
        %1035 = vmatprep.subr.bf16.mxu0 0
        %1036 = vmatpush1.bf16.msra.mxu0 0
        %1037 = vmatprep.subr.bf16.mxu0 0
        %1038 = vmatpush1.bf16.msra.mxu0 0
        %1039 = vmatprep.subr.bf16.mxu0 0
        %1040 = vmatpush1.bf16.msra.mxu0 0
        %1041 = vmatprep.subr.bf16.mxu0 0
        %1042 = vmatpush1.bf16.msra.mxu0 0
        %1043 = vmatprep.subr.bf16.mxu0 0
        %1044 = vmatpush1.bf16.msra.mxu0 0
        %1045 = vmatprep.subr.bf16.mxu0 0
        %1046 = vmatpush1.bf16.msra.mxu0 0
        %1047 = vmatprep.mubr.bf16.mxu0 0
        %1048 = vmatmul.mubr.bf16.gmra.mrb[0].mxu0 %v1010
        %v1049 = vpop.f32.mrb[0].mxu0
        %v1050 = vadd.f32 0.0, %v1049
        %v1051 = vpop.f32.mrb[0].mxu0
        %v1052 = vpop.f32.mrb[0].mxu0
        %v1053 = vpop.f32.mrb[0].mxu0
        %1054 = vdwg.mxu0
        %v1055 = vpack.c.bf16 %v1050, %v1050
        %v1057 = vunpack.c.l.b16 %v1055
        %v1058 = vpack.c.b16 %v1057, %v1057
        %1059 = vrot.lane.b32.xlu0 %v1058, 8
        %v1060 = vpop.permute.xlu0 %1059
        %vm1062 = vcmask 126016
        %1063 = vst.msk [vmem:[#allocation2] sm:$0xf] %vm1062, %v1060
        %1064 = vrot.lane.b32.xlu0 %v823, 112
        %v1065 = vpop.permute.xlu0 %1064
        %1066 = vrot.lane.b32.xlu0 %v824, 112
        %v1067 = vpop.permute.xlu0 %1066
        %v1069 = vsel %vm826, %v1065, 0
        %v1072 = vsel %vm826, %v1067, 0
        %1074 = vmatprep.subr.bf16.mxu0 0
        %1075 = vmatpush1.bf16.xpose.msra.mxu0 %v1072
        %1076 = vmatprep.subr.bf16.mxu0 0
        %1077 = vmatpush1.bf16.xpose.msra.mxu0 0
        %1078 = vmatprep.subr.bf16.mxu0 0
        %1079 = vmatpush1.bf16.xpose.msra.mxu0 0
        %1080 = vmatprep.subr.bf16.mxu0 0
        %1081 = vmatpush1.bf16.xpose.msra.mxu0 0
        %1082 = vmatprep.subr.bf16.mxu0 0
        %1083 = vmatpush1.bf16.xpose.msra.mxu0 0
        %1084 = vmatprep.subr.bf16.mxu0 0
        %1085 = vmatpush1.bf16.xpose.msra.mxu0 0
        %1086 = vmatprep.subr.bf16.mxu0 0
        %1087 = vmatpush1.bf16.xpose.msra.mxu0 0
        %1088 = vmatprep.subr.bf16.mxu0 0
        %1089 = vmatpush1.bf16.xpose.msra.mxu0 0
        %1090 = vmatprep.subr.bf16.mxu0 0
        %1091 = vmatpush1.bf16.xpose.msra.mxu0 0
        %1092 = vmatprep.subr.bf16.mxu0 0
        %1093 = vmatpush1.bf16.xpose.msra.mxu0 0
        %1094 = vmatprep.subr.bf16.mxu0 0
        %1095 = vmatpush1.bf16.xpose.msra.mxu0 0
        %1096 = vmatprep.subr.bf16.mxu0 0
        %1097 = vmatpush1.bf16.xpose.msra.mxu0 0
        %1098 = vmatprep.subr.bf16.mxu0 0
        %1099 = vmatpush1.bf16.xpose.msra.mxu0 0
        %1100 = vmatprep.subr.bf16.mxu0 0
        %1101 = vmatpush1.bf16.xpose.msra.mxu0 0
        %1102 = vmatprep.subr.bf16.mxu0 0
        %1103 = vmatpush1.bf16.xpose.msra.mxu0 0
        %1104 = vmatprep.subr.bf16.mxu0 0
        %1105 = vmatpush1.bf16.xpose.msra.mxu0 0
        %1106 = vmatprep.mubr.bf16.mxu0 0
        %1107 = vmatmul.mubr.bf16.gmra.mrb[0].mxu0 %v1069
        %v1108 = vpop.f32.mrb[0].mxu0
        %v1109 = vadd.f32 0.0, %v1108
        %v1110 = vpop.f32.mrb[0].mxu0
        %v1111 = vpop.f32.mrb[0].mxu0
        %v1112 = vpop.f32.mrb[0].mxu0
        %1113 = vdwg.mxu0
        %v1114 = vmul.f32 %v1109, 0.35355338
        %v1115 = vsel %vm822, -inf, %v1114
        %v1116 = vsel %vm826, %v1115, -inf
        %1117 = vmax.xlane.f32.xlu0 %v1116
        %v1118 = vpop.xlane.xlu0 %1117
        %v1119 = vsub.f32 %v1115, %v1118
        %v1120 = vmul.f32 %v1119, 1.442695
        %v1121 = vpow.pop %v1120
        %v1122 = vsel %vm826, %v1121, 0.0
        %1123 = vadd.xlane.f32.xlu0 %v1122
        %v1124 = vpop.xlane.xlu0 %1123
        %v1125 = vrcp.pop %v1124
        %v1126 = vmul.f32 %v1121, %v1125
        %v1127 = vpack.c.bf16 %v1126, %v1126
        %s1128 = scalar_lea.vmem %s617, 8 [#allocation16]
        %1129 = vst.msk [vmem:[%s1128] sm:$0xf] %vm887, %v1127
        %1130 = vrot.lane.b32.xlu0 %v825, 112
        %v1131 = vpop.permute.xlu0 %1130
        %v1133 = vsel %vm826, %v1127, 0
        %v1136 = vsel %vm892, %v1131, 0
        %1138 = vmatprep.subr.bf16.mxu0 0
        %1139 = vmatpush1.bf16.msra.mxu0 %v1136
        %1140 = vmatprep.subr.bf16.mxu0 0
        %1141 = vmatpush1.bf16.msra.mxu0 0
        %1142 = vmatprep.subr.bf16.mxu0 0
        %1143 = vmatpush1.bf16.msra.mxu0 0
        %1144 = vmatprep.subr.bf16.mxu0 0
        %1145 = vmatpush1.bf16.msra.mxu0 0
        %1146 = vmatprep.subr.bf16.mxu0 0
        %1147 = vmatpush1.bf16.msra.mxu0 0
        %1148 = vmatprep.subr.bf16.mxu0 0
        %1149 = vmatpush1.bf16.msra.mxu0 0
        %1150 = vmatprep.subr.bf16.mxu0 0
        %1151 = vmatpush1.bf16.msra.mxu0 0
        %1152 = vmatprep.subr.bf16.mxu0 0
        %1153 = vmatpush1.bf16.msra.mxu0 0
        %1154 = vmatprep.subr.bf16.mxu0 0
        %1155 = vmatpush1.bf16.msra.mxu0 0
        %1156 = vmatprep.subr.bf16.mxu0 0
        %1157 = vmatpush1.bf16.msra.mxu0 0
        %1158 = vmatprep.subr.bf16.mxu0 0
        %1159 = vmatpush1.bf16.msra.mxu0 0
        %1160 = vmatprep.subr.bf16.mxu0 0
        %1161 = vmatpush1.bf16.msra.mxu0 0
        %1162 = vmatprep.subr.bf16.mxu0 0
        %1163 = vmatpush1.bf16.msra.mxu0 0
        %1164 = vmatprep.subr.bf16.mxu0 0
        %1165 = vmatpush1.bf16.msra.mxu0 0
        %1166 = vmatprep.subr.bf16.mxu0 0
        %1167 = vmatpush1.bf16.msra.mxu0 0
        %1168 = vmatprep.subr.bf16.mxu0 0
        %1169 = vmatpush1.bf16.msra.mxu0 0
        %1170 = vmatprep.mubr.bf16.mxu0 0
        %1171 = vmatmul.mubr.bf16.gmra.mrb[0].mxu0 %v1133
        %v1172 = vpop.f32.mrb[0].mxu0
        %v1173 = vadd.f32 0.0, %v1172
        %v1174 = vpop.f32.mrb[0].mxu0
        %v1175 = vpop.f32.mrb[0].mxu0
        %v1176 = vpop.f32.mrb[0].mxu0
        %1177 = vdwg.mxu0
        %v1178 = vpack.c.bf16 %v1173, %v1173
        %v1180 = vunpack.c.l.b16 %v1178
        %v1181 = vpack.c.b16 %v1180, %v1180
        %1182 = vrot.lane.b32.xlu0 %v1181, 16
        %v1183 = vpop.permute.xlu0 %1182
        %vm1185 = vcmask 191616
        %1186 = vst.msk [vmem:[#allocation2] sm:$0xf] %vm1185, %v1183
        %1187 = vrot.lane.b32.xlu0 %v823, 104
        %v1188 = vpop.permute.xlu0 %1187
        %1189 = vrot.lane.b32.xlu0 %v824, 104
        %v1190 = vpop.permute.xlu0 %1189
        %v1192 = vsel %vm826, %v1188, 0
        %v1195 = vsel %vm826, %v1190, 0
        %1197 = vmatprep.subr.bf16.mxu0 0
        %1198 = vmatpush1.bf16.xpose.msra.mxu0 %v1195
        %1199 = vmatprep.subr.bf16.mxu0 0
        %1200 = vmatpush1.bf16.xpose.msra.mxu0 0
        %1201 = vmatprep.subr.bf16.mxu0 0
        %1202 = vmatpush1.bf16.xpose.msra.mxu0 0
        %1203 = vmatprep.subr.bf16.mxu0 0
        %1204 = vmatpush1.bf16.xpose.msra.mxu0 0
        %1205 = vmatprep.subr.bf16.mxu0 0
        %1206 = vmatpush1.bf16.xpose.msra.mxu0 0
        %1207 = vmatprep.subr.bf16.mxu0 0
        %1208 = vmatpush1.bf16.xpose.msra.mxu0 0
        %1209 = vmatprep.subr.bf16.mxu0 0
        %1210 = vmatpush1.bf16.xpose.msra.mxu0 0
        %1211 = vmatprep.subr.bf16.mxu0 0
        %1212 = vmatpush1.bf16.xpose.msra.mxu0 0
        %1213 = vmatprep.subr.bf16.mxu0 0
        %1214 = vmatpush1.bf16.xpose.msra.mxu0 0
        %1215 = vmatprep.subr.bf16.mxu0 0
        %1216 = vmatpush1.bf16.xpose.msra.mxu0 0
        %1217 = vmatprep.subr.bf16.mxu0 0
        %1218 = vmatpush1.bf16.xpose.msra.mxu0 0
        %1219 = vmatprep.subr.bf16.mxu0 0
        %1220 = vmatpush1.bf16.xpose.msra.mxu0 0
        %1221 = vmatprep.subr.bf16.mxu0 0
        %1222 = vmatpush1.bf16.xpose.msra.mxu0 0
        %1223 = vmatprep.subr.bf16.mxu0 0
        %1224 = vmatpush1.bf16.xpose.msra.mxu0 0
        %1225 = vmatprep.subr.bf16.mxu0 0
        %1226 = vmatpush1.bf16.xpose.msra.mxu0 0
        %1227 = vmatprep.subr.bf16.mxu0 0
        %1228 = vmatpush1.bf16.xpose.msra.mxu0 0
        %1229 = vmatprep.mubr.bf16.mxu0 0
        %1230 = vmatmul.mubr.bf16.gmra.mrb[0].mxu0 %v1192
        %v1231 = vpop.f32.mrb[0].mxu0
        %v1232 = vadd.f32 0.0, %v1231
        %v1233 = vpop.f32.mrb[0].mxu0
        %v1234 = vpop.f32.mrb[0].mxu0
        %v1235 = vpop.f32.mrb[0].mxu0
        %1236 = vdwg.mxu0
        %v1237 = vmul.f32 %v1232, 0.35355338
        %v1238 = vsel %vm822, -inf, %v1237
        %v1239 = vsel %vm826, %v1238, -inf
        %1240 = vmax.xlane.f32.xlu0 %v1239
        %v1241 = vpop.xlane.xlu0 %1240
        %v1242 = vsub.f32 %v1238, %v1241
        %v1243 = vmul.f32 %v1242, 1.442695
        %v1244 = vpow.pop %v1243
        %v1245 = vsel %vm826, %v1244, 0.0
        %1246 = vadd.xlane.f32.xlu0 %v1245
        %v1247 = vpop.xlane.xlu0 %1246
        %v1248 = vrcp.pop %v1247
        %v1249 = vmul.f32 %v1244, %v1248
        %v1250 = vpack.c.bf16 %v1249, %v1249
        %s1251 = scalar_lea.vmem %s617, 12 [#allocation16]
        %1252 = vst.msk [vmem:[%s1251] sm:$0xf] %vm887, %v1250
        %1253 = vrot.lane.b32.xlu0 %v825, 104
        %v1254 = vpop.permute.xlu0 %1253
        %v1256 = vsel %vm826, %v1250, 0
        %v1259 = vsel %vm892, %v1254, 0
        %1261 = vmatprep.subr.bf16.mxu0 0
        %1262 = vmatpush1.bf16.msra.mxu0 %v1259
        %1263 = vmatprep.subr.bf16.mxu0 0
        %1264 = vmatpush1.bf16.msra.mxu0 0
        %1265 = vmatprep.subr.bf16.mxu0 0
        %1266 = vmatpush1.bf16.msra.mxu0 0
        %1267 = vmatprep.subr.bf16.mxu0 0
        %1268 = vmatpush1.bf16.msra.mxu0 0
        %1269 = vmatprep.subr.bf16.mxu0 0
        %1270 = vmatpush1.bf16.msra.mxu0 0
        %1271 = vmatprep.subr.bf16.mxu0 0
        %1272 = vmatpush1.bf16.msra.mxu0 0
        %1273 = vmatprep.subr.bf16.mxu0 0
        %1274 = vmatpush1.bf16.msra.mxu0 0
        %1275 = vmatprep.subr.bf16.mxu0 0
        %1276 = vmatpush1.bf16.msra.mxu0 0
        %1277 = vmatprep.subr.bf16.mxu0 0
        %1278 = vmatpush1.bf16.msra.mxu0 0
        %1279 = vmatprep.subr.bf16.mxu0 0
        %1280 = vmatpush1.bf16.msra.mxu0 0
        %1281 = vmatprep.subr.bf16.mxu0 0
        %1282 = vmatpush1.bf16.msra.mxu0 0
        %1283 = vmatprep.subr.bf16.mxu0 0
        %1284 = vmatpush1.bf16.msra.mxu0 0
        %1285 = vmatprep.subr.bf16.mxu0 0
        %1286 = vmatpush1.bf16.msra.mxu0 0
        %1287 = vmatprep.subr.bf16.mxu0 0
        %1288 = vmatpush1.bf16.msra.mxu0 0
        %1289 = vmatprep.subr.bf16.mxu0 0
        %1290 = vmatpush1.bf16.msra.mxu0 0
        %1291 = vmatprep.subr.bf16.mxu0 0
        %1292 = vmatpush1.bf16.msra.mxu0 0
        %1293 = vmatprep.mubr.bf16.mxu0 0
        %1294 = vmatmul.mubr.bf16.gmra.mrb[0].mxu0 %v1256
        %v1295 = vpop.f32.mrb[0].mxu0
        %v1296 = vadd.f32 0.0, %v1295
        %v1297 = vpop.f32.mrb[0].mxu0
        %v1298 = vpop.f32.mrb[0].mxu0
        %v1299 = vpop.f32.mrb[0].mxu0
        %1300 = vdwg.mxu0
        %v1301 = vpack.c.bf16 %v1296, %v1296
        %v1303 = vunpack.c.l.b16 %v1301
        %v1304 = vpack.c.b16 %v1303, %v1303
        %1305 = vrot.lane.b32.xlu0 %v1304, 24
        %v1306 = vpop.permute.xlu0 %1305
        %vm1308 = vcmask 257216
        %1309 = vst.msk [vmem:[#allocation2] sm:$0xf] %vm1308, %v1306
        %v1310 = vld [vmem:[#allocation2] sm:$0xf]
        %v1311 = vld [vmem:[%s10] sm:$0xf]
        %v1312 = vld [vmem:[%s10 + $0x4] sm:$0xf]
        %v1313 = vld [vmem:[%s10 + $0x8] sm:$0xf]
        %v1314 = vld [vmem:[%s10 + $0xc] sm:$0xf]
        %v1315 = vld [vmem:[%s11] sm:$0x1]
        %v1317 = vlaneseq
        %v1318 = vshrl.u32 %v1317, 7
        %v1319 = vsub.s32 0, %v1318
        %v1320 = vrot.slane %v1315, %v1319
        %v1326 = vunpack.c.l.b16 %v1311
        %v1327 = vunpack.c.l.b16 %v1312
        %v1328 = vunpack.c.l.b16 %v1313
        %v1329 = vunpack.c.l.b16 %v1314
        %v1330 = vpack.c.b16 %v1327, %v1326
        %v1331 = vpack.c.b16 %v1329, %v1328
        %v1335 = vsel %vm643, %v1310, 0
        %1337 = vmatprep.subr.bf16.mxu0 0
        %1338 = vmatpush1.bf16.msra.mxu0 %v1330
        %1339 = vmatprep.subr.bf16.mxu0 0
        %1340 = vmatpush1.bf16.msra.mxu0 %v1331
        %1341 = vmatprep.subr.bf16.mxu0 0
        %1342 = vmatpush1.bf16.msra.mxu0 0
        %1343 = vmatprep.subr.bf16.mxu0 0
        %1344 = vmatpush1.bf16.msra.mxu0 0
        %1345 = vmatprep.subr.bf16.mxu0 0
        %1346 = vmatpush1.bf16.msra.mxu0 0
        %1347 = vmatprep.subr.bf16.mxu0 0
        %1348 = vmatpush1.bf16.msra.mxu0 0
        %1349 = vmatprep.subr.bf16.mxu0 0
        %1350 = vmatpush1.bf16.msra.mxu0 0
        %1351 = vmatprep.subr.bf16.mxu0 0
        %1352 = vmatpush1.bf16.msra.mxu0 0
        %1353 = vmatprep.subr.bf16.mxu0 0
        %1354 = vmatpush1.bf16.msra.mxu0 0
        %1355 = vmatprep.subr.bf16.mxu0 0
        %1356 = vmatpush1.bf16.msra.mxu0 0
        %1357 = vmatprep.subr.bf16.mxu0 0
        %1358 = vmatpush1.bf16.msra.mxu0 0
        %1359 = vmatprep.subr.bf16.mxu0 0
        %1360 = vmatpush1.bf16.msra.mxu0 0
        %1361 = vmatprep.subr.bf16.mxu0 0
        %1362 = vmatpush1.bf16.msra.mxu0 0
        %1363 = vmatprep.subr.bf16.mxu0 0
        %1364 = vmatpush1.bf16.msra.mxu0 0
        %1365 = vmatprep.subr.bf16.mxu0 0
        %1366 = vmatpush1.bf16.msra.mxu0 0
        %1367 = vmatprep.subr.bf16.mxu0 0
        %1368 = vmatpush1.bf16.msra.mxu0 0
        %1369 = vmatprep.mubr.bf16.mxu0 0
        %1370 = vmatmul.mubr.bf16.gmra.mrb[0].mxu0 %v1335
        %v1371 = vpop.f32.mrb[0].mxu0
        %v1372 = vadd.f32 %v1320, %v1371
        %v1373 = vpop.f32.mrb[0].mxu0
        %v1374 = vpop.f32.mrb[0].mxu0
        %v1375 = vpop.f32.mrb[0].mxu0
        %1376 = vdwg.mxu0
        %v1377 = vpack.c.bf16 %v1372, %v1372
        %vm1378 = vcmask 257024
        %1379 = vst.msk [vmem:[%s610] sm:$0xf] %vm1378, %v1377
        %s1380 = sand.u32 %s335, 1
        %s1381 = scalar_lea.sflag [#allocation5], %s1380
        %s1382 = sand.u32 %s335, 1
        %s1383 = smul.addr %s1382, 4
        %s1384 = scalar_lea.vmem [#allocation15], %s1383
        %s1385 = sand.u32 %s363, 1
        %s1386 = scalar_lea.sflag [#allocation17], %s1385
        %s1387 = sand.u32 %s363, 1
        %s1388 = smul.addr %s1387, 16
        %s1389 = scalar_lea.vmem [#allocation16], %s1388
        // Predicated region
        $region97: #{tpu_custom_call.1} parent=67 // pred_check
          %p1390 = pneg %p345
        $region98: #{tpu_custom_call.1} parent=67 // pred_check_branch
          %1392 = sbr.rel (%p1390) target = $region100
        $region99: #{tpu_custom_call.1} parent=67 // pred_region
          %s1394 = ssub.s32 64, 64
          %1395 = vsyncadd %s1381, %s1394
          %s1396 = sadd.s32 %s44, %s43
          %s1397 = smul.addr %s1396, 64
          %s1398 = scalar_lea.hbm %s12, %s1397
          %s1400 = sshll.u32 %s1384, 4
          %s1401 = int_to_ptr.vmem [resolvable:$true] %s1400
          %1403 = dma.vmem_to_hbm [thread:$0]  %s1401, 64, %s1398, %s1381
        $region100: #{tpu_custom_call.1} parent=67 // pred_fallthru
          _
        // Predicated region
        $region101: #{tpu_custom_call.1} parent=67 // pred_check
          %p1404 = pneg %p373
        $region102: #{tpu_custom_call.1} parent=67 // pred_check_branch
          %1406 = sbr.rel (%p1404) target = $region104
        $region103: #{tpu_custom_call.1} parent=67 // pred_region
          %s1408 = ssub.s32 256, 256
          %1409 = vsyncadd %s1386, %s1408
          %s1410 = smul.addr %s43, 4
          %s1411 = sadd.s32 %s44, %s1410
          %s1412 = smul.addr %s1411, 64
          %s1413 = scalar_lea.hbm %s13, %s1412
          %s1414 = sshll.u32 %s1389, 4
          %s1415 = int_to_ptr.vmem [resolvable:$true] %s1414
          %1420 = dma.vmem_to_hbm [thread:$0]  %s1415, 256, %s1413, %s1386, 64, 64, 4
        $region104: #{tpu_custom_call.1} parent=67 // pred_fallthru
          _
      $region68: #{tpu_custom_call.1} parent=5 // pred_fallthru
        _
      %p1421 = scmp.le.s32.totalorder 2, %s34
      // Predicated region
      $region105: #{tpu_custom_call.1} parent=5 // pred_check
        %p1422 = pneg %p1421
      $region106: #{tpu_custom_call.1} parent=5 // pred_check_branch
        %1424 = sbr.rel (%p1422) target = $region108
      $region107: #{tpu_custom_call.1} parent=5 // pred_region
        %s1425 = ssub.s32 %s34, 2
        // Predicated region
        $region109: #{tpu_custom_call.1} parent=107 // pred_check
          %p1426 = pneg %p351
        $region110: #{tpu_custom_call.1} parent=107 // pred_check_branch
          %1428 = sbr.rel (%p1426) target = $region112
        $region111: #{tpu_custom_call.1} parent=107 // pred_region
          %s1429 = sand.u32 %s336, 1
          %s1430 = scalar_lea.sflag [#allocation5], %s1429
          %s1431 = sand.u32 %s336, 1
          %s1432 = smul.addr %s1431, 4
          %s1433 = scalar_lea.vmem [#allocation15], %s1432
          %1434 = dma.done %s1430, 64
        $region112: #{tpu_custom_call.1} parent=107 // pred_fallthru
          _
        // Predicated region
        $region113: #{tpu_custom_call.1} parent=107 // pred_check
          %p1435 = pneg %p379
        $region114: #{tpu_custom_call.1} parent=107 // pred_check_branch
          %1437 = sbr.rel (%p1435) target = $region116
        $region115: #{tpu_custom_call.1} parent=107 // pred_region
          %s1438 = sand.u32 %s364, 1
          %s1439 = scalar_lea.sflag [#allocation17], %s1438
          %s1440 = sand.u32 %s364, 1
          %s1441 = smul.addr %s1440, 16
          %s1442 = scalar_lea.vmem [#allocation16], %s1441
          %1443 = dma.done %s1439, 256
        $region116: #{tpu_custom_call.1} parent=107 // pred_fallthru
          _
      $region108: #{tpu_custom_call.1} parent=5 // pred_fallthru
        _
    $region6: #{tpu_custom_call.1} parent=1 // loop_footer
      %s38 = sadd.s32 1, %s34
    $region7: #{tpu_custom_call.1} parent=1 // loop_footer_branch
      %33 = sbr.rel target = $region3
    $region8: #{tpu_custom_call.1} parent=1 // loop_exit
      _
    %1444 = vsyncpa [#allocation4], 1
    %s1445 = scalar_lea.sflag [#allocation4], 1
    %1446 = vsyncpa %s1445, 1
    %1447 = vsyncpa [#allocation7], 1
    %s1448 = scalar_lea.sflag [#allocation7], 1
    %1449 = vsyncpa %s1448, 1
    %1450 = vsyncpa [#allocation10], 1
    %1451 = vsyncpa [#allocation13], 1
    %1452 = vsyncpa [#allocation5], 1
    %s1453 = scalar_lea.sflag [#allocation5], 1
    %1454 = vsyncpa %s1453, 1
    %1455 = vsyncpa [#allocation17], 1
    %s1456 = scalar_lea.sflag [#allocation17], 1
    %1457 = vsyncpa %s1456, 1

</llo_original>
